<compile_context>
chip_gen: v7x
topology: tpu7x:2x2x1
jax: 0.10.0
libtpu: 0.0.40
codegen_flags: <defaults>
</compile_context>

<pallas_src>
import functools

import jax
import jax.numpy as jnp
from jax import lax
from jax.experimental import pallas as pl
from jax.experimental.pallas import tpu as pltpu

_NEG_BIG = -1e30


def _round_up(x, m):
    return ((x + m - 1) // m) * m


def _vmem_budget_bytes():
    """0.85x of per-core VMEM, clamped to [32 MiB, 100 MiB]; conservative fallback."""
    cap = None
    try:
        cap = getattr(pltpu.get_tpu_info(), "vmem_capacity_bytes", None)
    except Exception:
        cap = None
    if not cap:
        cap = 64 << 20                      # assume v7x-sized VMEM if unknown
    return int(min(max(int(0.85 * cap), 32 << 20), 100 << 20))


# ---------------------------------------------------------------------------
# Kernels: online log-sum-exp over contrast tiles (flash-attention style).
#   per row:  sum_j mask_j * log_prob_j = S_pos - pos_cnt * LSE_masked
#   with      LSE_masked = m + log(l),   l = sum_j lmask_j * exp(adc_j - m)
# ---------------------------------------------------------------------------

def _online_update(k_idx, adc, lmask, s_pos, m_ref, l_ref, s_ref):
    @pl.when(k_idx == 0)
    def _():
        m_ref[...] = jnp.full_like(m_ref, _NEG_BIG)
        l_ref[...] = jnp.zeros_like(l_ref)
        s_ref[...] = jnp.zeros_like(s_ref)

    tile_max = jnp.max(jnp.where(lmask, adc, _NEG_BIG), axis=1, keepdims=True)
    m_new = jnp.maximum(m_ref[...], tile_max)
    alpha = jnp.exp(m_ref[...] - m_new)
    p_sum = jnp.sum(jnp.where(lmask, jnp.exp(adc - m_new), 0.0),
                    axis=1, keepdims=True)
    l_ref[...] = alpha * l_ref[...] + p_sum
    s_ref[...] = s_ref[...] + s_pos
    m_ref[...] = m_new


def _finalize(cnt_ref, m_ref, l_ref, s_ref, out_ref, temperature, base_temperature):
    pos_cnt = cnt_ref[...]                                   # raw (unclamped) count
    lse = m_ref[...] + jnp.log(l_ref[...])
    denom = jnp.where(pos_cnt < 1e-6, 1.0, pos_cnt)          # torch clamp semantics
    mean_log_prob_pos = (s_ref[...] - pos_cnt * lse) / denom
    out_ref[...] = -(temperature / base_temperature) * mean_log_prob_pos


def _supcon_labels_kernel(alab_ref, clab_ref, cnt_ref, anchor_ref, contrast_ref,
                          out_ref, m_ref, l_ref, s_ref, *,
                          inv_temperature, temperature, base_temperature,
                          tile_m, tile_n, n_contrast_valid):
    i = pl.program_id(0)
    k = pl.program_id(1)

    adc = lax.dot_general(anchor_ref[...], contrast_ref[...],
                          (((1,), (1,)), ((), ())),
                          preferred_element_type=jnp.float32) * inv_temperature
    tm, tn = adc.shape

    col = lax.broadcasted_iota(jnp.int32, (tm, tn), 1)                 # local cols
    row = lax.broadcasted_iota(jnp.int32, (tm, 1), 0) + (i * tile_m - k * tile_n)
    lmask = col != row                                                 # self-pair excl.
    if n_contrast_valid is not None:                                   # padded Nc cols
        lmask = jnp.logical_and(lmask, col < (n_contrast_valid - k * tile_n))

    pos = jnp.logical_and(alab_ref[...] == clab_ref[...], lmask)       # boolean mask
    s_pos = jnp.sum(jnp.where(pos, adc, 0.0), axis=1, keepdims=True)

    _online_update(k, adc, lmask, s_pos, m_ref, l_ref, s_ref)

    @pl.when(k == pl.num_programs(1) - 1)
    def _():
        _finalize(cnt_ref, m_ref, l_ref, s_ref, out_ref, temperature, base_temperature)


def _supcon_mask_kernel(mask_ref, cnt_ref, anchor_ref, contrast_ref,
                        out_ref, m_ref, l_ref, s_ref, *,
                        inv_temperature, temperature, base_temperature,
                        tile_m, tile_n, n_contrast_valid):
    i = pl.program_id(0)
    k = pl.program_id(1)

    adc = lax.dot_general(anchor_ref[...], contrast_ref[...],
                          (((1,), (1,)), ((), ())),
                          preferred_element_type=jnp.float32) * inv_temperature
    tm, tn = adc.shape

    col = lax.broadcasted_iota(jnp.int32, (tm, tn), 1)
    row = lax.broadcasted_iota(jnp.int32, (tm, 1), 0) + (i * tile_m - k * tile_n)
    lmask = col != row
    if n_contrast_valid is not None:
        lmask = jnp.logical_and(lmask, col < (n_contrast_valid - k * tile_n))

    # Weighted (float) user mask values are preserved, matching torch semantics.
    w = jnp.where(lmask, mask_ref[...], 0.0)
    s_pos = jnp.sum(w * adc, axis=1, keepdims=True)

    _online_update(k, adc, lmask, s_pos, m_ref, l_ref, s_ref)

    @pl.when(k == pl.num_programs(1) - 1)
    def _():
        _finalize(cnt_ref, m_ref, l_ref, s_ref, out_ref, temperature, base_temperature)


# ---------------------------------------------------------------------------
# Wrapper
# ---------------------------------------------------------------------------

def supcon_loss(features, labels=None, mask=None, *, temperature=0.07,
                contrast_mode='all', base_temperature=0.07,
                matmul_dtype=jnp.bfloat16, tile_m=None, tile_n=None):
    """JAX/Pallas equivalent of SupConLoss.forward."""
    if features.ndim < 3:
        raise ValueError('`features` needs to be [bsz, n_views, ...]')
    B = features.shape[0]
    V = features.shape[1]
    feats = features.reshape(B, V, -1).astype(jnp.float32)
    D = feats.shape[-1]

    if labels is not None and mask is not None:
        raise ValueError('Cannot define both `labels` and `mask`')
    use_labels = mask is None
    if use_labels:
        if labels is None:
            lab = jnp.arange(B, dtype=jnp.int32)         # eye(B): each sample its own class
        else:
            lab = jnp.asarray(labels).reshape(-1).astype(jnp.int32)
            if lab.shape[0] != B:
                raise ValueError('Num of labels does not match num of features')
    else:
        base_mask = jnp.asarray(mask).astype(jnp.float32)   # (B,B), weighted / asymmetric ok

    # contrast_feature = cat(unbind(features, dim=1), dim=0) -> view-major rows
    contrast = jnp.transpose(feats, (1, 0, 2)).reshape(V * B, D)
    if contrast_mode == 'one':
        anchor = feats[:, 0]
        anchor_count = 1
    elif contrast_mode == 'all':
        anchor = contrast
        anchor_count = V
    else:
        raise ValueError(f'Unknown mode: {contrast_mode}')

    Na = anchor_count * B
    Nc = V * B

    budget = _vmem_budget_bytes()
    itemsize = jnp.dtype(matmul_dtype).itemsize

    # --- anchor (row) tile: bigger on 128 MiB parts, >=2 tiles for megacore ---
    if tile_m is None:
        tile_m = 256 if budget >= (80 << 20) else 128
    tm = min(_round_up(int(tile_m), 8), _round_up(Na, 8))
    if Na > 8 and _round_up(Na, tm) == tm:
        tm = max(8, _round_up((Na + 1) // 2, 8))
    na_pad = _round_up(Na, tm)
    row_pad = na_pad - Na

    # --- contrast (column / reduction) tile: largest 128-multiple within budget ---
    nc_full = _round_up(Nc, 128)

    def _step_bytes(tn_):
        b = 2 * tm * D * itemsize            # anchor tile, double buffered
        b += 2 * tn_ * D * itemsize          # contrast tile (worst case double buffered)
        b += 10 * tm * tn_ * 4               # live (tm,tn) f32/int32 temporaries
        if not use_labels:
            b += 2 * tm * tn_ * 4            # f32 mask tile, double buffered
        b += 2 * tn_ * 4 + 8 * tm * 4        # contrast labels + per-row vectors/scratch
        b += 4 << 20                         # compiler-internal scratch headroom
        return b

    if tile_n is None:
        tn = nc_full
        while tn > 128 and _step_bytes(tn) > budget:
            tn -= 128
    else:
        tn = min(_round_up(int(tile_n), 128), nc_full)
    nc_pad = _round_up(Nc, tn)
    kt = nc_pad // tn
    col_pad = nc_pad - Nc
    grid = (na_pad // tm, kt)

    # --- operands ---
    anchor = anchor.astype(matmul_dtype)
    contrast = contrast.astype(matmul_dtype)
    if row_pad:
        anchor = jnp.pad(anchor, ((0, row_pad), (0, 0)))
    if col_pad:
        contrast = jnp.pad(contrast, ((0, col_pad), (0, 0)))

    # pos_cnt precomputed per anchor row (raw sum; kernel clamps the divisor only).
    if use_labels:
        c_b = jnp.sum(lab[:, None] == lab[None, :], axis=1).astype(jnp.float32)   # (B,)
        cnt = V * jnp.tile(c_b, anchor_count) - 1.0                                # minus self pair
    else:
        row_sum = jnp.sum(base_mask, axis=1)
        diag = jnp.diagonal(base_mask)
        cnt = jnp.tile(V * row_sum - diag, anchor_count)
    if row_pad:
        cnt = jnp.pad(cnt, (0, row_pad))
    cnt = cnt.reshape(na_pad, 1)

    if use_labels:
        alab = jnp.tile(lab, anchor_count)
        if row_pad:
            alab = jnp.pad(alab, (0, row_pad))
        alab = alab.reshape(na_pad, 1)
        clab = jnp.tile(lab, V)
        if col_pad:
            clab = jnp.pad(clab, (0, col_pad))
        clab = clab.reshape(1, nc_pad)
    else:
        m_full = jnp.tile(base_mask, (anchor_count, V))
        m_full = jnp.pad(m_full, ((0, row_pad), (0, col_pad)))

    kernel_kwargs = dict(
        inv_temperature=float(1.0 / temperature),
        temperature=float(temperature),
        base_temperature=float(base_temperature),
        tile_m=tm, tile_n=tn,
        n_contrast_valid=(Nc if col_pad else None),
    )
    compiler_params = pltpu.CompilerParams(
        dimension_semantics=("parallel", "arbitrary"),
        vmem_limit_bytes=budget,
    )
    out_shape = jax.ShapeDtypeStruct((na_pad, 1), jnp.float32)
    scratch = [pltpu.VMEM((tm, 1), jnp.float32)] * 3          # running max / sum / S_pos

    def _run(single_buffer_resident):
        pipeline_kw = dict(pipeline_mode=pl.Buffered(1)) if single_buffer_resident else {}
        anchor_spec = pl.BlockSpec((tm, D), lambda i, k: (i, 0))
        contrast_spec = pl.BlockSpec((tn, D), lambda i, k: (k, 0), **pipeline_kw)
        cnt_spec = pl.BlockSpec((tm, 1), lambda i, k: (i, 0))
        out_spec = pl.BlockSpec((tm, 1), lambda i, k: (i, 0))
        if use_labels:
            in_specs = [
                pl.BlockSpec((tm, 1), lambda i, k: (i, 0)),                 # anchor labels
                pl.BlockSpec((1, tn), lambda i, k: (0, k), **pipeline_kw),  # contrast labels
                cnt_spec, anchor_spec, contrast_spec,
            ]
            kernel = functools.partial(_supcon_labels_kernel, **kernel_kwargs)
            operands = (alab, clab, cnt, anchor, contrast)
        else:
            in_specs = [
                pl.BlockSpec((tm, tn), lambda i, k: (i, k)),                # f32 mask tile
                cnt_spec, anchor_spec, contrast_spec,
            ]
            kernel = functools.partial(_supcon_mask_kernel, **kernel_kwargs)
            operands = (m_full, cnt, anchor, contrast)
        return pl.pallas_call(
            kernel,
            out_shape=out_shape,
            grid_spec=pltpu.PrefetchScalarGridSpec(
                num_scalar_prefetch=0,
                grid=grid,
                in_specs=in_specs,
                out_specs=out_spec,
                scratch_shapes=scratch,
            ),
            compiler_params=compiler_params,
        )(*operands)

    if kt == 1:
        # Contrast / contrast-label blocks never change: single-buffer them to halve
        # their VMEM footprint; fall back to default double-buffering if unsupported.
        try:
            loss_rows = _run(True)
        except Exception:
            loss_rows = _run(False)
    else:
        loss_rows = _run(False)

    # loss.view(anchor_count, batch_size).mean() == mean over the Na valid rows
    return jnp.mean(loss_rows[:Na, 0])


# ---------------------------------------------------------------------------
# Pure-JAX reference (mirrors the PyTorch module) for verification.
# ---------------------------------------------------------------------------

def supcon_loss_reference(features, labels=None, mask=None, *, temperature=0.07,
                          contrast_mode='all', base_temperature=0.07):
    B, V = features.shape[0], features.shape[1]
    feats = features.reshape(B, V, -1).astype(jnp.float32)
    if labels is None and mask is None:
        m = jnp.eye(B, dtype=jnp.float32)
    elif labels is not None:
        lab = labels.reshape(-1, 1)
        m = (lab == lab.T).astype(jnp.float32)
    else:
        m = mask.astype(jnp.float32)
    contrast = jnp.transpose(feats, (1, 0, 2)).reshape(V * B, -1)
    anchor = contrast if contrast_mode == 'all' else feats[:, 0]
    anchor_count = V if contrast_mode == 'all' else 1
    Na = anchor_count * B
    adc = (anchor @ contrast.T) / temperature
    logits = adc - jnp.max(adc, axis=1, keepdims=True)
    m_full = jnp.tile(m, (anchor_count, V))
    idx = jnp.arange(Na)
    lmask = jnp.ones_like(m_full).at[idx, idx].set(0.0)
    m_full = m_full * lmask
    exp_logits = jnp.exp(logits) * lmask
    log_prob = logits - jnp.log(exp_logits.sum(1, keepdims=True))
    pos = m_full.sum(1)
    pos_c = jnp.where(pos < 1e-6, 1.0, pos)
    mean_lp = (m_full * log_prob).sum(1) / pos_c
    loss = -(temperature / base_temperature) * mean_lp
    return loss.reshape(anchor_count, B).mean()


if __name__ == "__main__":
    key = jax.random.PRNGKey(0)
    k1, k2, k3, k4, k5 = jax.random.split(key, 5)
    f32 = jnp.float32

    # --- small primary shapes ---
    B, V, D = 8, 2, 32
    feats = jax.random.normal(k1, (B, V, D), dtype=jnp.float32)
    feats = feats / jnp.linalg.norm(feats, axis=-1, keepdims=True)
    labels = jax.random.randint(k2, (B,), 0, 4)

    # 1) supervised, contrast_mode='all' (labels path, masks rebuilt in-kernel)
    l = jax.block_until_ready(supcon_loss(feats, labels=labels, matmul_dtype=f32))
    lr = supcon_loss_reference(feats, labels=labels)
    assert jnp.allclose(l, lr, rtol=1e-4, atol=1e-4), ("labels/all", l, lr)

    # 2) SimCLR degenerate case (labels=None, mask=None)
    l = jax.block_until_ready(supcon_loss(feats, matmul_dtype=f32))
    lr = supcon_loss_reference(feats)
    assert jnp.allclose(l, lr, rtol=1e-4, atol=1e-4), ("simclr", l, lr)

    # 3) explicit weighted / non-binary float mask path
    m = (labels.reshape(-1, 1) == labels.reshape(1, -1)).astype(jnp.float32)
    m = m * (0.5 + 0.5 * jax.random.uniform(k5, (B, B), dtype=jnp.float32))
    l = jax.block_until_ready(supcon_loss(feats, mask=m, matmul_dtype=f32))
    lr = supcon_loss_reference(feats, mask=m)
    assert jnp.allclose(l, lr, rtol=1e-4, atol=1e-4), ("weighted mask", l, lr)

    # 4) contrast_mode='one'
    l = jax.block_until_ready(supcon_loss(feats, labels=labels, contrast_mode='one',
                                          matmul_dtype=f32))
    lr = supcon_loss_reference(feats, labels=labels, contrast_mode='one')
    assert jnp.allclose(l, lr, rtol=1e-4, atol=1e-4), ("one", l, lr)

    # 5) multi-row-tile grid + row/col padding (Na=Nc=200)
    B2, V2, D2 = 100, 2, 64
    f2 = jax.random.normal(k3, (B2, V2, D2), dtype=jnp.float32)
    f2 = f2 / jnp.linalg.norm(f2, axis=-1, keepdims=True)
    lab2 = jax.random.randint(k4, (B2,), 0, 10)
    l = jax.block_until_ready(supcon_loss(f2, labels=lab2, matmul_dtype=f32))
    lr = supcon_loss_reference(f2, labels=lab2)
    assert jnp.allclose(l, lr, rtol=1e-4, atol=1e-4), ("tiled rows", l, lr)

    # 6) force the multi-contrast-tile online-LSE path (tile_n=128 -> kt=2)
    l = jax.block_until_ready(supcon_loss(f2, labels=lab2, matmul_dtype=f32, tile_n=128))
    assert jnp.allclose(l, lr, rtol=1e-4, atol=1e-4), ("tiled cols / online LSE", l, lr)

    # 7) default bf16 matmul inputs (f32 accumulation) vs bf16-rounded reference
    f2_bf = f2.astype(jnp.bfloat16).astype(jnp.float32)
    l = jax.block_until_ready(supcon_loss(f2, labels=lab2))
    lr_bf = supcon_loss_reference(f2_bf, labels=lab2)
    assert jnp.allclose(l, lr_bf, rtol=5e-3, atol=5e-3), ("bf16 default", l, lr_bf)

    print("KERNEL_OK")
</pallas_src>

<mosaic_0001>
module attributes {stable_mosaic.version = 11 : i64} {
  func.func @_supcon_labels_kernel(%arg0: i32, %arg1: i32, %arg2: memref<8x1xi32, #tpu.memory_space<vmem>>, %arg3: memref<1x128xi32, #tpu.memory_space<vmem>>, %arg4: memref<8x1xf32, #tpu.memory_space<vmem>>, %arg5: memref<8x32xf32, #tpu.memory_space<vmem>>, %arg6: memref<128x32xf32, #tpu.memory_space<vmem>>, %arg7: memref<8x1xf32, #tpu.memory_space<vmem>>, %arg8: memref<8x1xf32, #tpu.memory_space<vmem>>, %arg9: memref<8x1xf32, #tpu.memory_space<vmem>>, %arg10: memref<8x1xf32, #tpu.memory_space<vmem>>) attributes {dimension_semantics = [#tpu.dimension_semantics<parallel>, #tpu.dimension_semantics<arbitrary>], iteration_bounds = array<i64: 2, 1>, scalar_prefetch = 0 : i64, scratch_operands = 3 : i64, tpu.core_type = #tpu.core_type<tc>, window_params = [{transform_indices = @transform_0, window_bounds = array<i64: 8, 1>}, {pipeline_mode = #tpu.pipeline_mode<synchronous>, transform_indices = @transform_1, window_bounds = array<i64: 1, 128>}, {transform_indices = @transform_2, window_bounds = array<i64: 8, 1>}, {transform_indices = @transform_3, window_bounds = array<i64: 8, 32>}, {pipeline_mode = #tpu.pipeline_mode<synchronous>, transform_indices = @transform_4, window_bounds = array<i64: 128, 32>}, {transform_indices = @transform_5, window_bounds = array<i64: 8, 1>}]} {
    %c0 = arith.constant 0 : index
    %c0_0 = arith.constant 0 : index
    %0 = vector.load %arg5[%c0, %c0_0] : memref<8x32xf32, #tpu.memory_space<vmem>>, vector<8x32xf32>
    %c0_1 = arith.constant 0 : index
    %c0_2 = arith.constant 0 : index
    %1 = vector.load %arg6[%c0_1, %c0_2] : memref<128x32xf32, #tpu.memory_space<vmem>>, vector<128x32xf32>
    %cst = arith.constant dense<0.000000e+00> : vector<8x128xf32>
    %2 = tpu.matmul %0, %1, %cst {dimension_numbers = #tpu.dot_dimension_numbers<[1], [1], [0], [0], [0, 0, 1, 0], [], []>} : vector<8x32xf32>, vector<128x32xf32>, vector<8x128xf32> -> vector<8x128xf32>
    %cst_3 = arith.constant 14.2857141 : f32
    %3 = vector.broadcast %cst_3 : f32 to vector<8x128xf32>
    %4 = arith.mulf %2, %3 : vector<8x128xf32>
    %5 = tpu.iota {dimensions = array<i32: 1>} : vector<8x128xi32>
    %6 = tpu.iota {dimensions = array<i32: 0>} : vector<8x1xi32>
    %c8_i32 = arith.constant 8 : i32
    %7 = arith.muli %arg0, %c8_i32 : i32
    %c128_i32 = arith.constant 128 : i32
    %8 = arith.muli %arg1, %c128_i32 : i32
    %9 = arith.subi %7, %8 : i32
    %10 = vector.broadcast %9 : i32 to vector<8x1xi32>
    %11 = arith.addi %6, %10 : vector<8x1xi32>
    %12 = vector.broadcast %11 : vector<8x1xi32> to vector<8x128xi32>
    %13 = arith.cmpi ne, %5, %12 : vector<8x128xi32>
    %c128_i32_4 = arith.constant 128 : i32
    %14 = arith.muli %arg1, %c128_i32_4 : i32
    %c16_i32 = arith.constant 16 : i32
    %15 = arith.subi %c16_i32, %14 : i32
    %16 = vector.broadcast %15 : i32 to vector<8x128xi32>
    %17 = arith.cmpi slt, %5, %16 : vector<8x128xi32>
    %18 = arith.andi %13, %17 : vector<8x128xi1>
    %c0_5 = arith.constant 0 : index
    %c0_6 = arith.constant 0 : index
    %19 = vector.load %arg2[%c0_5, %c0_6] : memref<8x1xi32, #tpu.memory_space<vmem>>, vector<8x1xi32>
    %c0_7 = arith.constant 0 : index
    %c0_8 = arith.constant 0 : index
    %20 = vector.load %arg3[%c0_7, %c0_8] : memref<1x128xi32, #tpu.memory_space<vmem>>, vector<1x128xi32>
    %21 = vector.broadcast %19 : vector<8x1xi32> to vector<8x128xi32>
    %22 = vector.broadcast %20 : vector<1x128xi32> to vector<8x128xi32>
    %23 = arith.cmpi eq, %21, %22 : vector<8x128xi32>
    %24 = arith.andi %23, %18 : vector<8x128xi1>
    %cst_9 = arith.constant 0.000000e+00 : f32
    %25 = vector.broadcast %cst_9 : f32 to vector<8x128xf32>
    %26 = arith.select %24, %4, %25 : vector<8x128xi1>, vector<8x128xf32>
    %cst_10 = arith.constant dense<0.000000e+00> : vector<8xf32>
    %27 = vector.multi_reduction <add>, %26, %cst_10 [1] : vector<8x128xf32> to vector<8xf32>
    %28 = vector.shape_cast %27 : vector<8xf32> to vector<8x1xf32>
    %c0_i32 = arith.constant 0 : i32
    %29 = arith.cmpi eq, %arg1, %c0_i32 : i32
    %30 = arith.extui %29 : i1 to i32
    %c0_i32_11 = arith.constant 0 : i32
    %31 = arith.cmpi ne, %30, %c0_i32_11 : i32
    scf.if %31 {
      %cst_32 = arith.constant -1.000000e+30 : f32
      %59 = vector.broadcast %cst_32 : f32 to vector<8x1xf32>
      %c0_33 = arith.constant 0 : index
      %c0_34 = arith.constant 0 : index
      %60 = vector.load %arg8[%c0_33, %c0_34] : memref<8x1xf32, #tpu.memory_space<vmem>>, vector<8x1xf32>
      tpu.vector_store %arg8[%c0_33, %c0_34], %59 {strides = array<i32>} : memref<8x1xf32, #tpu.memory_space<vmem>>, vector<8x1xf32>,
      %cst_35 = arith.constant 0.000000e+00 : f32
      %61 = vector.broadcast %cst_35 : f32 to vector<8x1xf32>
      %c0_36 = arith.constant 0 : index
      %c0_37 = arith.constant 0 : index
      %62 = vector.load %arg9[%c0_36, %c0_37] : memref<8x1xf32, #tpu.memory_space<vmem>>, vector<8x1xf32>
      tpu.vector_store %arg9[%c0_36, %c0_37], %61 {strides = array<i32>} : memref<8x1xf32, #tpu.memory_space<vmem>>, vector<8x1xf32>,
      %cst_38 = arith.constant 0.000000e+00 : f32
      %63 = vector.broadcast %cst_38 : f32 to vector<8x1xf32>
      %c0_39 = arith.constant 0 : index
      %c0_40 = arith.constant 0 : index
      %64 = vector.load %arg10[%c0_39, %c0_40] : memref<8x1xf32, #tpu.memory_space<vmem>>, vector<8x1xf32>
      tpu.vector_store %arg10[%c0_39, %c0_40], %63 {strides = array<i32>} : memref<8x1xf32, #tpu.memory_space<vmem>>, vector<8x1xf32>,
    } else {
    }
    %cst_12 = arith.constant -1.000000e+30 : f32
    %32 = vector.broadcast %cst_12 : f32 to vector<8x128xf32>
    %33 = arith.select %18, %4, %32 : vector<8x128xi1>, vector<8x128xf32>
    %cst_13 = arith.constant dense<0xFF800000> : vector<8xf32>
    %34 = vector.multi_reduction <maximumf>, %33, %cst_13 [1] : vector<8x128xf32> to vector<8xf32>
    %35 = vector.shape_cast %34 : vector<8xf32> to vector<8x1xf32>
    %c0_14 = arith.constant 0 : index
    %c0_15 = arith.constant 0 : index
    %36 = vector.load %arg8[%c0_14, %c0_15] : memref<8x1xf32, #tpu.memory_space<vmem>>, vector<8x1xf32>
    %37 = arith.maximumf %36, %35 : vector<8x1xf32>
    %c0_16 = arith.constant 0 : index
    %c0_17 = arith.constant 0 : index
    %38 = vector.load %arg8[%c0_16, %c0_17] : memref<8x1xf32, #tpu.memory_space<vmem>>, vector<8x1xf32>
    %39 = arith.subf %38, %37 : vector<8x1xf32>
    %40 = math.exp %39 : vector<8x1xf32>
    %41 = vector.broadcast %37 : vector<8x1xf32> to vector<8x128xf32>
    %42 = arith.subf %4, %41 : vector<8x128xf32>
    %43 = math.exp %42 : vector<8x128xf32>
    %cst_18 = arith.constant 0.000000e+00 : f32
    %44 = vector.broadcast %cst_18 : f32 to vector<8x128xf32>
    %45 = arith.select %18, %43, %44 : vector<8x128xi1>, vector<8x128xf32>
    %cst_19 = arith.constant dense<0.000000e+00> : vector<8xf32>
    %46 = vector.multi_reduction <add>, %45, %cst_19 [1] : vector<8x128xf32> to vector<8xf32>
    %47 = vector.shape_cast %46 : vector<8xf32> to vector<8x1xf32>
    %c0_20 = arith.constant 0 : index
    %c0_21 = arith.constant 0 : index
    %48 = vector.load %arg9[%c0_20, %c0_21] : memref<8x1xf32, #tpu.memory_space<vmem>>, vector<8x1xf32>
    %49 = arith.mulf %40, %48 : vector<8x1xf32>
    %50 = arith.addf %49, %47 : vector<8x1xf32>
    %c0_22 = arith.constant 0 : index
    %c0_23 = arith.constant 0 : index
    %51 = vector.load %arg9[%c0_22, %c0_23] : memref<8x1xf32, #tpu.memory_space<vmem>>, vector<8x1xf32>
    tpu.vector_store %arg9[%c0_22, %c0_23], %50 {strides = array<i32>} : memref<8x1xf32, #tpu.memory_space<vmem>>, vector<8x1xf32>,
    %c0_24 = arith.constant 0 : index
    %c0_25 = arith.constant 0 : index
    %52 = vector.load %arg10[%c0_24, %c0_25] : memref<8x1xf32, #tpu.memory_space<vmem>>, vector<8x1xf32>
    %53 = arith.addf %52, %28 : vector<8x1xf32>
    %c0_26 = arith.constant 0 : index
    %c0_27 = arith.constant 0 : index
    %54 = vector.load %arg10[%c0_26, %c0_27] : memref<8x1xf32, #tpu.memory_space<vmem>>, vector<8x1xf32>
    tpu.vector_store %arg10[%c0_26, %c0_27], %53 {strides = array<i32>} : memref<8x1xf32, #tpu.memory_space<vmem>>, vector<8x1xf32>,
    %c0_28 = arith.constant 0 : index
    %c0_29 = arith.constant 0 : index
    %55 = vector.load %arg8[%c0_28, %c0_29] : memref<8x1xf32, #tpu.memory_space<vmem>>, vector<8x1xf32>
    tpu.vector_store %arg8[%c0_28, %c0_29], %37 {strides = array<i32>} : memref<8x1xf32, #tpu.memory_space<vmem>>, vector<8x1xf32>,
    %c0_i32_30 = arith.constant 0 : i32
    %56 = arith.cmpi eq, %arg1, %c0_i32_30 : i32
    %57 = arith.extui %56 : i1 to i32
    %c0_i32_31 = arith.constant 0 : i32
    %58 = arith.cmpi ne, %57, %c0_i32_31 : i32
    scf.if %58 {
      %c0_32 = arith.constant 0 : index
      %c0_33 = arith.constant 0 : index
      %59 = vector.load %arg4[%c0_32, %c0_33] : memref<8x1xf32, #tpu.memory_space<vmem>>, vector<8x1xf32>
      %c0_34 = arith.constant 0 : index
      %c0_35 = arith.constant 0 : index
      %60 = vector.load %arg8[%c0_34, %c0_35] : memref<8x1xf32, #tpu.memory_space<vmem>>, vector<8x1xf32>
      %c0_36 = arith.constant 0 : index
      %c0_37 = arith.constant 0 : index
      %61 = vector.load %arg9[%c0_36, %c0_37] : memref<8x1xf32, #tpu.memory_space<vmem>>, vector<8x1xf32>
      %62 = math.log %61 : vector<8x1xf32>
      %63 = arith.addf %60, %62 : vector<8x1xf32>
      %cst_38 = arith.constant 9.99999997E-7 : f32
      %64 = vector.broadcast %cst_38 : f32 to vector<8x1xf32>
      %65 = arith.cmpf olt, %59, %64 : vector<8x1xf32>
      %cst_39 = arith.constant 1.000000e+00 : f32
      %66 = vector.broadcast %cst_39 : f32 to vector<8x1xf32>
      %67 = arith.select %65, %66, %59 : vector<8x1xi1>, vector<8x1xf32>
      %c0_40 = arith.constant 0 : index
      %c0_41 = arith.constant 0 : index
      %68 = vector.load %arg10[%c0_40, %c0_41] : memref<8x1xf32, #tpu.memory_space<vmem>>, vector<8x1xf32>
      %69 = arith.mulf %59, %63 : vector<8x1xf32>
      %70 = arith.subf %68, %69 : vector<8x1xf32>
      %71 = arith.divf %70, %67 : vector<8x1xf32>
      %cst_42 = arith.constant -1.000000e+00 : f32
      %72 = vector.broadcast %cst_42 : f32 to vector<8x1xf32>
      %73 = arith.mulf %72, %71 : vector<8x1xf32>
      %c0_43 = arith.constant 0 : index
      %c0_44 = arith.constant 0 : index
      %74 = vector.load %arg7[%c0_43, %c0_44] : memref<8x1xf32, #tpu.memory_space<vmem>>, vector<8x1xf32>
      tpu.vector_store %arg7[%c0_43, %c0_44], %73 {strides = array<i32>} : memref<8x1xf32, #tpu.memory_space<vmem>>, vector<8x1xf32>,
    } else {
    }
    return
  }
  func.func @transform_0(%arg0: i32, %arg1: i32) -> (i32, i32) {
    %c0_i32 = arith.constant 0 : i32
    %c0_i32_0 = arith.constant 0 : i32
    return %arg0, %c0_i32 : i32, i32
  }
  func.func @transform_1(%arg0: i32, %arg1: i32) -> (i32, i32) {
    %c0_i32 = arith.constant 0 : i32
    %c0_i32_0 = arith.constant 0 : i32
    return %c0_i32, %arg1 : i32, i32
  }
  func.func @transform_2(%arg0: i32, %arg1: i32) -> (i32, i32) {
    %c0_i32 = arith.constant 0 : i32
    %c0_i32_0 = arith.constant 0 : i32
    return %arg0, %c0_i32 : i32, i32
  }
  func.func @transform_3(%arg0: i32, %arg1: i32) -> (i32, i32) {
    %c0_i32 = arith.constant 0 : i32
    %c0_i32_0 = arith.constant 0 : i32
    return %arg0, %c0_i32 : i32, i32
  }
  func.func @transform_4(%arg0: i32, %arg1: i32) -> (i32, i32) {
    %c0_i32 = arith.constant 0 : i32
    %c0_i32_0 = arith.constant 0 : i32
    return %arg1, %c0_i32 : i32, i32
  }
  func.func @transform_5(%arg0: i32, %arg1: i32) -> (i32, i32) {
    %c0_i32 = arith.constant 0 : i32
    %c0_i32_0 = arith.constant 0 : i32
    return %arg0, %c0_i32 : i32, i32
  }
}

module attributes {stable_mosaic.version = 11 : i64} {
  func.func @_supcon_labels_kernel(%arg0: i32, %arg1: i32, %arg2: memref<8x1xi32, #tpu.memory_space<vmem>>, %arg3: memref<1x128xi32, #tpu.memory_space<vmem>>, %arg4: memref<8x1xf32, #tpu.memory_space<vmem>>, %arg5: memref<8x32xf32, #tpu.memory_space<vmem>>, %arg6: memref<128x32xf32, #tpu.memory_space<vmem>>, %arg7: memref<8x1xf32, #tpu.memory_space<vmem>>, %arg8: memref<8x1xf32, #tpu.memory_space<vmem>>, %arg9: memref<8x1xf32, #tpu.memory_space<vmem>>, %arg10: memref<8x1xf32, #tpu.memory_space<vmem>>) attributes {dimension_semantics = [#tpu.dimension_semantics<parallel>, #tpu.dimension_semantics<arbitrary>], iteration_bounds = array<i64: 2, 1>, scalar_prefetch = 0 : i64, scratch_operands = 3 : i64, tpu.core_type = #tpu.core_type<tc>, window_params = [{transform_indices = @transform_0, window_bounds = array<i64: 8, 1>}, {transform_indices = @transform_1, window_bounds = array<i64: 1, 128>}, {transform_indices = @transform_2, window_bounds = array<i64: 8, 1>}, {transform_indices = @transform_3, window_bounds = array<i64: 8, 32>}, {transform_indices = @transform_4, window_bounds = array<i64: 128, 32>}, {transform_indices = @transform_5, window_bounds = array<i64: 8, 1>}]} {
    %c0 = arith.constant 0 : index
    %c0_0 = arith.constant 0 : index
    %0 = vector.load %arg5[%c0, %c0_0] : memref<8x32xf32, #tpu.memory_space<vmem>>, vector<8x32xf32>
    %c0_1 = arith.constant 0 : index
    %c0_2 = arith.constant 0 : index
    %1 = vector.load %arg6[%c0_1, %c0_2] : memref<128x32xf32, #tpu.memory_space<vmem>>, vector<128x32xf32>
    %cst = arith.constant dense<0.000000e+00> : vector<8x128xf32>
    %2 = tpu.matmul %0, %1, %cst {dimension_numbers = #tpu.dot_dimension_numbers<[1], [1], [0], [0], [0, 0, 1, 0], [], []>} : vector<8x32xf32>, vector<128x32xf32>, vector<8x128xf32> -> vector<8x128xf32>
    %cst_3 = arith.constant 14.2857141 : f32
    %3 = vector.broadcast %cst_3 : f32 to vector<8x128xf32>
    %4 = arith.mulf %2, %3 : vector<8x128xf32>
    %5 = tpu.iota {dimensions = array<i32: 1>} : vector<8x128xi32>
    %6 = tpu.iota {dimensions = array<i32: 0>} : vector<8x1xi32>
    %c8_i32 = arith.constant 8 : i32
    %7 = arith.muli %arg0, %c8_i32 : i32
    %c128_i32 = arith.constant 128 : i32
    %8 = arith.muli %arg1, %c128_i32 : i32
    %9 = arith.subi %7, %8 : i32
    %10 = vector.broadcast %9 : i32 to vector<8x1xi32>
    %11 = arith.addi %6, %10 : vector<8x1xi32>
    %12 = vector.broadcast %11 : vector<8x1xi32> to vector<8x128xi32>
    %13 = arith.cmpi ne, %5, %12 : vector<8x128xi32>
    %c128_i32_4 = arith.constant 128 : i32
    %14 = arith.muli %arg1, %c128_i32_4 : i32
    %c16_i32 = arith.constant 16 : i32
    %15 = arith.subi %c16_i32, %14 : i32
    %16 = vector.broadcast %15 : i32 to vector<8x128xi32>
    %17 = arith.cmpi slt, %5, %16 : vector<8x128xi32>
    %18 = arith.andi %13, %17 : vector<8x128xi1>
    %c0_5 = arith.constant 0 : index
    %c0_6 = arith.constant 0 : index
    %19 = vector.load %arg2[%c0_5, %c0_6] : memref<8x1xi32, #tpu.memory_space<vmem>>, vector<8x1xi32>
    %c0_7 = arith.constant 0 : index
    %c0_8 = arith.constant 0 : index
    %20 = vector.load %arg3[%c0_7, %c0_8] : memref<1x128xi32, #tpu.memory_space<vmem>>, vector<1x128xi32>
    %21 = vector.broadcast %19 : vector<8x1xi32> to vector<8x128xi32>
    %22 = vector.broadcast %20 : vector<1x128xi32> to vector<8x128xi32>
    %23 = arith.cmpi eq, %21, %22 : vector<8x128xi32>
    %24 = arith.andi %23, %18 : vector<8x128xi1>
    %cst_9 = arith.constant 0.000000e+00 : f32
    %25 = vector.broadcast %cst_9 : f32 to vector<8x128xf32>
    %26 = arith.select %24, %4, %25 : vector<8x128xi1>, vector<8x128xf32>
    %cst_10 = arith.constant dense<0.000000e+00> : vector<8xf32>
    %27 = vector.multi_reduction <add>, %26, %cst_10 [1] : vector<8x128xf32> to vector<8xf32>
    %28 = vector.shape_cast %27 : vector<8xf32> to vector<8x1xf32>
    %c0_i32 = arith.constant 0 : i32
    %29 = arith.cmpi eq, %arg1, %c0_i32 : i32
    %30 = arith.extui %29 : i1 to i32
    %c0_i32_11 = arith.constant 0 : i32
    %31 = arith.cmpi ne, %30, %c0_i32_11 : i32
    scf.if %31 {
      %cst_32 = arith.constant -1.000000e+30 : f32
      %59 = vector.broadcast %cst_32 : f32 to vector<8x1xf32>
      %c0_33 = arith.constant 0 : index
      %c0_34 = arith.constant 0 : index
      %60 = vector.load %arg8[%c0_33, %c0_34] : memref<8x1xf32, #tpu.memory_space<vmem>>, vector<8x1xf32>
      tpu.vector_store %arg8[%c0_33, %c0_34], %59 {strides = array<i32>} : memref<8x1xf32, #tpu.memory_space<vmem>>, vector<8x1xf32>,
      %cst_35 = arith.constant 0.000000e+00 : f32
      %61 = vector.broadcast %cst_35 : f32 to vector<8x1xf32>
      %c0_36 = arith.constant 0 : index
      %c0_37 = arith.constant 0 : index
      %62 = vector.load %arg9[%c0_36, %c0_37] : memref<8x1xf32, #tpu.memory_space<vmem>>, vector<8x1xf32>
      tpu.vector_store %arg9[%c0_36, %c0_37], %61 {strides = array<i32>} : memref<8x1xf32, #tpu.memory_space<vmem>>, vector<8x1xf32>,
      %cst_38 = arith.constant 0.000000e+00 : f32
      %63 = vector.broadcast %cst_38 : f32 to vector<8x1xf32>
      %c0_39 = arith.constant 0 : index
      %c0_40 = arith.constant 0 : index
      %64 = vector.load %arg10[%c0_39, %c0_40] : memref<8x1xf32, #tpu.memory_space<vmem>>, vector<8x1xf32>
      tpu.vector_store %arg10[%c0_39, %c0_40], %63 {strides = array<i32>} : memref<8x1xf32, #tpu.memory_space<vmem>>, vector<8x1xf32>,
    } else {
    }
    %cst_12 = arith.constant -1.000000e+30 : f32
    %32 = vector.broadcast %cst_12 : f32 to vector<8x128xf32>
    %33 = arith.select %18, %4, %32 : vector<8x128xi1>, vector<8x128xf32>
    %cst_13 = arith.constant dense<0xFF800000> : vector<8xf32>
    %34 = vector.multi_reduction <maximumf>, %33, %cst_13 [1] : vector<8x128xf32> to vector<8xf32>
    %35 = vector.shape_cast %34 : vector<8xf32> to vector<8x1xf32>
    %c0_14 = arith.constant 0 : index
    %c0_15 = arith.constant 0 : index
    %36 = vector.load %arg8[%c0_14, %c0_15] : memref<8x1xf32, #tpu.memory_space<vmem>>, vector<8x1xf32>
    %37 = arith.maximumf %36, %35 : vector<8x1xf32>
    %c0_16 = arith.constant 0 : index
    %c0_17 = arith.constant 0 : index
    %38 = vector.load %arg8[%c0_16, %c0_17] : memref<8x1xf32, #tpu.memory_space<vmem>>, vector<8x1xf32>
    %39 = arith.subf %38, %37 : vector<8x1xf32>
    %40 = math.exp %39 : vector<8x1xf32>
    %41 = vector.broadcast %37 : vector<8x1xf32> to vector<8x128xf32>
    %42 = arith.subf %4, %41 : vector<8x128xf32>
    %43 = math.exp %42 : vector<8x128xf32>
    %cst_18 = arith.constant 0.000000e+00 : f32
    %44 = vector.broadcast %cst_18 : f32 to vector<8x128xf32>
    %45 = arith.select %18, %43, %44 : vector<8x128xi1>, vector<8x128xf32>
    %cst_19 = arith.constant dense<0.000000e+00> : vector<8xf32>
    %46 = vector.multi_reduction <add>, %45, %cst_19 [1] : vector<8x128xf32> to vector<8xf32>
    %47 = vector.shape_cast %46 : vector<8xf32> to vector<8x1xf32>
    %c0_20 = arith.constant 0 : index
    %c0_21 = arith.constant 0 : index
    %48 = vector.load %arg9[%c0_20, %c0_21] : memref<8x1xf32, #tpu.memory_space<vmem>>, vector<8x1xf32>
    %49 = arith.mulf %40, %48 : vector<8x1xf32>
    %50 = arith.addf %49, %47 : vector<8x1xf32>
    %c0_22 = arith.constant 0 : index
    %c0_23 = arith.constant 0 : index
    %51 = vector.load %arg9[%c0_22, %c0_23] : memref<8x1xf32, #tpu.memory_space<vmem>>, vector<8x1xf32>
    tpu.vector_store %arg9[%c0_22, %c0_23], %50 {strides = array<i32>} : memref<8x1xf32, #tpu.memory_space<vmem>>, vector<8x1xf32>,
    %c0_24 = arith.constant 0 : index
    %c0_25 = arith.constant 0 : index
    %52 = vector.load %arg10[%c0_24, %c0_25] : memref<8x1xf32, #tpu.memory_space<vmem>>, vector<8x1xf32>
    %53 = arith.addf %52, %28 : vector<8x1xf32>
    %c0_26 = arith.constant 0 : index
    %c0_27 = arith.constant 0 : index
    %54 = vector.load %arg10[%c0_26, %c0_27] : memref<8x1xf32, #tpu.memory_space<vmem>>, vector<8x1xf32>
    tpu.vector_store %arg10[%c0_26, %c0_27], %53 {strides = array<i32>} : memref<8x1xf32, #tpu.memory_space<vmem>>, vector<8x1xf32>,
    %c0_28 = arith.constant 0 : index
    %c0_29 = arith.constant 0 : index
    %55 = vector.load %arg8[%c0_28, %c0_29] : memref<8x1xf32, #tpu.memory_space<vmem>>, vector<8x1xf32>
    tpu.vector_store %arg8[%c0_28, %c0_29], %37 {strides = array<i32>} : memref<8x1xf32, #tpu.memory_space<vmem>>, vector<8x1xf32>,
    %c0_i32_30 = arith.constant 0 : i32
    %56 = arith.cmpi eq, %arg1, %c0_i32_30 : i32
    %57 = arith.extui %56 : i1 to i32
    %c0_i32_31 = arith.constant 0 : i32
    %58 = arith.cmpi ne, %57, %c0_i32_31 : i32
    scf.if %58 {
      %c0_32 = arith.constant 0 : index
      %c0_33 = arith.constant 0 : index
      %59 = vector.load %arg4[%c0_32, %c0_33] : memref<8x1xf32, #tpu.memory_space<vmem>>, vector<8x1xf32>
      %c0_34 = arith.constant 0 : index
      %c0_35 = arith.constant 0 : index
      %60 = vector.load %arg8[%c0_34, %c0_35] : memref<8x1xf32, #tpu.memory_space<vmem>>, vector<8x1xf32>
      %c0_36 = arith.constant 0 : index
      %c0_37 = arith.constant 0 : index
      %61 = vector.load %arg9[%c0_36, %c0_37] : memref<8x1xf32, #tpu.memory_space<vmem>>, vector<8x1xf32>
      %62 = math.log %61 : vector<8x1xf32>
      %63 = arith.addf %60, %62 : vector<8x1xf32>
      %cst_38 = arith.constant 9.99999997E-7 : f32
      %64 = vector.broadcast %cst_38 : f32 to vector<8x1xf32>
      %65 = arith.cmpf olt, %59, %64 : vector<8x1xf32>
      %cst_39 = arith.constant 1.000000e+00 : f32
      %66 = vector.broadcast %cst_39 : f32 to vector<8x1xf32>
      %67 = arith.select %65, %66, %59 : vector<8x1xi1>, vector<8x1xf32>
      %c0_40 = arith.constant 0 : index
      %c0_41 = arith.constant 0 : index
      %68 = vector.load %arg10[%c0_40, %c0_41] : memref<8x1xf32, #tpu.memory_space<vmem>>, vector<8x1xf32>
      %69 = arith.mulf %59, %63 : vector<8x1xf32>
      %70 = arith.subf %68, %69 : vector<8x1xf32>
      %71 = arith.divf %70, %67 : vector<8x1xf32>
      %cst_42 = arith.constant -1.000000e+00 : f32
      %72 = vector.broadcast %cst_42 : f32 to vector<8x1xf32>
      %73 = arith.mulf %72, %71 : vector<8x1xf32>
      %c0_43 = arith.constant 0 : index
      %c0_44 = arith.constant 0 : index
      %74 = vector.load %arg7[%c0_43, %c0_44] : memref<8x1xf32, #tpu.memory_space<vmem>>, vector<8x1xf32>
      tpu.vector_store %arg7[%c0_43, %c0_44], %73 {strides = array<i32>} : memref<8x1xf32, #tpu.memory_space<vmem>>, vector<8x1xf32>,
    } else {
    }
    return
  }
  func.func @transform_0(%arg0: i32, %arg1: i32) -> (i32, i32) {
    %c0_i32 = arith.constant 0 : i32
    %c0_i32_0 = arith.constant 0 : i32
    return %arg0, %c0_i32 : i32, i32
  }
  func.func @transform_1(%arg0: i32, %arg1: i32) -> (i32, i32) {
    %c0_i32 = arith.constant 0 : i32
    %c0_i32_0 = arith.constant 0 : i32
    return %c0_i32, %arg1 : i32, i32
  }
  func.func @transform_2(%arg0: i32, %arg1: i32) -> (i32, i32) {
    %c0_i32 = arith.constant 0 : i32
    %c0_i32_0 = arith.constant 0 : i32
    return %arg0, %c0_i32 : i32, i32
  }
  func.func @transform_3(%arg0: i32, %arg1: i32) -> (i32, i32) {
    %c0_i32 = arith.constant 0 : i32
    %c0_i32_0 = arith.constant 0 : i32
    return %arg0, %c0_i32 : i32, i32
  }
  func.func @transform_4(%arg0: i32, %arg1: i32) -> (i32, i32) {
    %c0_i32 = arith.constant 0 : i32
    %c0_i32_0 = arith.constant 0 : i32
    return %arg1, %c0_i32 : i32, i32
  }
  func.func @transform_5(%arg0: i32, %arg1: i32) -> (i32, i32) {
    %c0_i32 = arith.constant 0 : i32
    %c0_i32_0 = arith.constant 0 : i32
    return %arg0, %c0_i32 : i32, i32
  }
}

</mosaic_0001>

<llo_original>
// kernel: tpu_custom_call.1
$region0: #{tpu_custom_call.1}
  #allocation0 [shape = 'u32[]', space=smem, size = 0x4, offset = 0x4, fixed_abs, tag = 'smem constant byte address 0x4 - core index']
  #allocation1 [shape = 'u32[144,128]{1,0:T(1,128)}', space=vmem, size = 0x12000, scoped, tag = 'internal scratch']
  #allocation2 [shape = 'f32[8,1]{1,0:T(8,128)}', space=vmem, size = 0x1000, scoped, tag = 'scratch operand']
  #allocation3 [shape = 'f32[8,1]{1,0:T(8,128)}', space=vmem, size = 0x1000, scoped, tag = 'scratch operand']
  #allocation4 [shape = 'f32[8,1]{1,0:T(8,128)}', space=vmem, size = 0x1000, scoped, tag = 'scratch operand']
  %s0 = inlined_call_operand.vmem [shape: s32[16,1], index: 0, kind: input, shape index: {}]
  %s1 = inlined_call_operand.vmem [shape: s32[1,128], index: 1, kind: input, shape index: {}]
  %s2 = inlined_call_operand.vmem [shape: f32[16,1], index: 2, kind: input, shape index: {}]
  %s3 = inlined_call_operand.vmem [shape: f32[16,32], index: 3, kind: input, shape index: {}]
  %s4 = inlined_call_operand.vmem [shape: f32[128,32], index: 4, kind: input, shape index: {}]
  %s5 = inlined_call_operand.vmem [shape: f32[16,1], index: 5, kind: output, shape index: {}]
  %s6 = sld [smem:[#allocation0]]
  $region61: #{tpu_custom_call.1} parent=0
    _
  %s8 = ssub.s32 1, %s6
  %s9 = scalar_select 0, %s8, %s6
  loop: start=0, step=1, limit=4
  $region2: #{tpu_custom_call.1} parent=0 // loop_pre_header
    _
  $region3: #{tpu_custom_call.1} parent=0 // loop_header
    %s11 = sphi 0, %s15
    %p12 = scmp.ge.s32.totalorder %s11, 4
    %s18 = sphi 0, %s30
    %s19 = sphi 0, %s26
    %s20 = sphi 0, %s18
    %s21 = sphi 0, %s19
    %s22 = sphi 0, %s20
    %s23 = sphi 0, %s21
    %s33 = sphi 0, %s35
    %s36 = sphi 0, %s33
    %s37 = sphi 0, %s36
    %s53 = sphi 0, %s37
    %s59 = sphi 0, %s61
    %s62 = sphi 0, %s59
    %s63 = sphi 0, %s62
    %s79 = sphi 0, %s63
    %s85 = sphi 0, %s87
    %s88 = sphi 0, %s85
    %s89 = sphi 0, %s88
    %s105 = sphi 0, %s89
    %s111 = sphi 0, %s113
    %s114 = sphi 0, %s111
    %s115 = sphi 0, %s114
    %s131 = sphi 0, %s115
    %s137 = sphi 0, %s139
    %s140 = sphi 0, %s137
    %s141 = sphi 0, %s140
    %s157 = sphi 0, %s141
    %s163 = sphi 0, %s165
    %s166 = sphi 0, %s163
    %s167 = sphi 0, %s166
    %s183 = sphi 0, %s167
  $region4: #{tpu_custom_call.1} parent=0 // loop_header_branch
    %14 = sbr.rel (%p12) target = $region8
  $region5: #{tpu_custom_call.1} parent=0 // loop_body
    %s16 = ssub.s32 %s11, 1
    %s17 = ssub.s32 %s11, 2
    %s24 = sadd.s32 1, %s19
    %p25 = scmp.ge.s32.totalorder %s24, 1
    %s26 = scalar_select %p25, 0, %s24
    %s27 = sadd.s32 1, %s18
    %s28 = scalar_select %p25, %s27, %s18
    %p29 = scmp.ge.s32.totalorder %s28, 2
    %s30 = scalar_select %p29, 0, %s28
    %s31 = ssub.s32 %s18, %s30
    %p32 = scmp.eq.s32.totalorder %s31, 0
    %s34 = sadd.s32 %s33, 1
    %s35 = scalar_select %p32, %s33, %s34
    %p38 = pneg %p32
    %p39 = scmp.eq.s32.totalorder %s11, 1
    %p40 = por %p38, %p39
    %p41 = scmp.ne.s32.totalorder %s33, %s36
    %p42 = scmp.eq.s32.totalorder %s11, 0
    %p43 = por %p41, %p42
    %p44 = scmp.ne.s32.totalorder %s33, %s36
    %p45 = scmp.eq.s32.totalorder %s16, 1
    %p46 = por %p44, %p45
    %p47 = scmp.ne.s32.totalorder %s36, %s37
    %p48 = scmp.eq.s32.totalorder %s16, 0
    %p49 = por %p47, %p48
    %p50 = scmp.ne.s32.totalorder %s36, %s37
    %p51 = scmp.eq.s32.totalorder %s17, 1
    %p52 = por %p50, %p51
    %p54 = scmp.ne.s32.totalorder %s37, %s53
    %p55 = scmp.eq.s32.totalorder %s17, 0
    %p56 = por %p54, %p55
    %s57 = ssub.s32 %s19, %s26
    %p58 = scmp.eq.s32.totalorder %s57, 0
    %s60 = sadd.s32 %s59, 1
    %s61 = scalar_select %p58, %s59, %s60
    %p64 = pneg %p58
    %p65 = scmp.eq.s32.totalorder %s11, 1
    %p66 = por %p64, %p65
    %p67 = scmp.ne.s32.totalorder %s59, %s62
    %p68 = scmp.eq.s32.totalorder %s11, 0
    %p69 = por %p67, %p68
    %p70 = scmp.ne.s32.totalorder %s59, %s62
    %p71 = scmp.eq.s32.totalorder %s16, 1
    %p72 = por %p70, %p71
    %p73 = scmp.ne.s32.totalorder %s62, %s63
    %p74 = scmp.eq.s32.totalorder %s16, 0
    %p75 = por %p73, %p74
    %p76 = scmp.ne.s32.totalorder %s62, %s63
    %p77 = scmp.eq.s32.totalorder %s17, 1
    %p78 = por %p76, %p77
    %p80 = scmp.ne.s32.totalorder %s63, %s79
    %p81 = scmp.eq.s32.totalorder %s17, 0
    %p82 = por %p80, %p81
    %s83 = ssub.s32 %s18, %s30
    %p84 = scmp.eq.s32.totalorder %s83, 0
    %s86 = sadd.s32 %s85, 1
    %s87 = scalar_select %p84, %s85, %s86
    %p90 = pneg %p84
    %p91 = scmp.eq.s32.totalorder %s11, 1
    %p92 = por %p90, %p91
    %p93 = scmp.ne.s32.totalorder %s85, %s88
    %p94 = scmp.eq.s32.totalorder %s11, 0
    %p95 = por %p93, %p94
    %p96 = scmp.ne.s32.totalorder %s85, %s88
    %p97 = scmp.eq.s32.totalorder %s16, 1
    %p98 = por %p96, %p97
    %p99 = scmp.ne.s32.totalorder %s88, %s89
    %p100 = scmp.eq.s32.totalorder %s16, 0
    %p101 = por %p99, %p100
    %p102 = scmp.ne.s32.totalorder %s88, %s89
    %p103 = scmp.eq.s32.totalorder %s17, 1
    %p104 = por %p102, %p103
    %p106 = scmp.ne.s32.totalorder %s89, %s105
    %p107 = scmp.eq.s32.totalorder %s17, 0
    %p108 = por %p106, %p107
    %s109 = ssub.s32 %s18, %s30
    %p110 = scmp.eq.s32.totalorder %s109, 0
    %s112 = sadd.s32 %s111, 1
    %s113 = scalar_select %p110, %s111, %s112
    %p116 = pneg %p110
    %p117 = scmp.eq.s32.totalorder %s11, 1
    %p118 = por %p116, %p117
    %p119 = scmp.ne.s32.totalorder %s111, %s114
    %p120 = scmp.eq.s32.totalorder %s11, 0
    %p121 = por %p119, %p120
    %p122 = scmp.ne.s32.totalorder %s111, %s114
    %p123 = scmp.eq.s32.totalorder %s16, 1
    %p124 = por %p122, %p123
    %p125 = scmp.ne.s32.totalorder %s114, %s115
    %p126 = scmp.eq.s32.totalorder %s16, 0
    %p127 = por %p125, %p126
    %p128 = scmp.ne.s32.totalorder %s114, %s115
    %p129 = scmp.eq.s32.totalorder %s17, 1
    %p130 = por %p128, %p129
    %p132 = scmp.ne.s32.totalorder %s115, %s131
    %p133 = scmp.eq.s32.totalorder %s17, 0
    %p134 = por %p132, %p133
    %s135 = ssub.s32 %s19, %s26
    %p136 = scmp.eq.s32.totalorder %s135, 0
    %s138 = sadd.s32 %s137, 1
    %s139 = scalar_select %p136, %s137, %s138
    %p142 = pneg %p136
    %p143 = scmp.eq.s32.totalorder %s11, 1
    %p144 = por %p142, %p143
    %p145 = scmp.ne.s32.totalorder %s137, %s140
    %p146 = scmp.eq.s32.totalorder %s11, 0
    %p147 = por %p145, %p146
    %p148 = scmp.ne.s32.totalorder %s137, %s140
    %p149 = scmp.eq.s32.totalorder %s16, 1
    %p150 = por %p148, %p149
    %p151 = scmp.ne.s32.totalorder %s140, %s141
    %p152 = scmp.eq.s32.totalorder %s16, 0
    %p153 = por %p151, %p152
    %p154 = scmp.ne.s32.totalorder %s140, %s141
    %p155 = scmp.eq.s32.totalorder %s17, 1
    %p156 = por %p154, %p155
    %p158 = scmp.ne.s32.totalorder %s141, %s157
    %p159 = scmp.eq.s32.totalorder %s17, 0
    %p160 = por %p158, %p159
    %s161 = ssub.s32 %s18, %s30
    %p162 = scmp.eq.s32.totalorder %s161, 0
    %s164 = sadd.s32 %s163, 1
    %s165 = scalar_select %p162, %s163, %s164
    %p168 = pneg %p162
    %p169 = scmp.eq.s32.totalorder %s11, 1
    %p170 = por %p168, %p169
    %p171 = scmp.ne.s32.totalorder %s163, %s166
    %p172 = scmp.eq.s32.totalorder %s11, 0
    %p173 = por %p171, %p172
    %p174 = scmp.ne.s32.totalorder %s163, %s166
    %p175 = scmp.eq.s32.totalorder %s16, 1
    %p176 = por %p174, %p175
    %p177 = scmp.ne.s32.totalorder %s166, %s167
    %p178 = scmp.eq.s32.totalorder %s16, 0
    %p179 = por %p177, %p178
    %p180 = scmp.ne.s32.totalorder %s166, %s167
    %p181 = scmp.eq.s32.totalorder %s17, 1
    %p182 = por %p180, %p181
    %p184 = scmp.ne.s32.totalorder %s167, %s183
    %p185 = scmp.eq.s32.totalorder %s17, 0
    %p186 = por %p184, %p185
    %p187 = scmp.le.s32.totalorder 1, %s11
    %p188 = scmp.lt.s32.totalorder %s11, 3
    %p189 = pnand %p187, %p188
    %p190 = pneg %p189
    // Predicated region
    $region9: #{tpu_custom_call.1} parent=5 // pred_check
      _
    $region10: #{tpu_custom_call.1} parent=5 // pred_check_branch
      %192 = sbr.rel (%p189) target = $region12
    $region11: #{tpu_custom_call.1} parent=5 // pred_region
      %s193 = ssub.s32 %s11, 1
      // Predicated region
      $region13: #{tpu_custom_call.1} parent=11 // pred_check
        %p194 = pneg %p75
      $region14: #{tpu_custom_call.1} parent=11 // pred_check_branch
        %196 = sbr.rel (%p194) target = $region16
      $region15: #{tpu_custom_call.1} parent=11 // pred_region
        %p197 = scmp.lt.s32.totalorder %s21, 0
        %s198 = scalar_select %p197, %s21, 0
        %s199 = scalar_lea.vmem %s1, %s198
      $region16: #{tpu_custom_call.1} parent=11 // pred_fallthru
        _
      // Predicated region
      $region17: #{tpu_custom_call.1} parent=11 // pred_check
        %p200 = pneg %p153
      $region18: #{tpu_custom_call.1} parent=11 // pred_check_branch
        %202 = sbr.rel (%p200) target = $region20
      $region19: #{tpu_custom_call.1} parent=11 // pred_region
        %s203 = smul.u32 16, %s21
        %p204 = scmp.lt.s32.totalorder %s203, 15
        %s205 = scalar_select %p204, %s203, 15
        %s206 = smul.addr %s205, 8
        %s207 = scalar_lea.vmem %s4, %s206
        %s208 = smul.u32 16, %s21
      $region20: #{tpu_custom_call.1} parent=11 // pred_fallthru
        _
    $region12: #{tpu_custom_call.1} parent=5 // pred_fallthru
      _
    %p209 = scmp.lt.s32.totalorder %s11, 2
    // Predicated region
    $region21: #{tpu_custom_call.1} parent=5 // pred_check
      %p210 = pneg %p209
    $region22: #{tpu_custom_call.1} parent=5 // pred_check_branch
      %212 = sbr.rel (%p210) target = $region24
    $region23: #{tpu_custom_call.1} parent=5 // pred_region
      // Predicated region
      $region25: #{tpu_custom_call.1} parent=23 // pred_check
        %p213 = pneg %p43
      $region26: #{tpu_custom_call.1} parent=23 // pred_check_branch
        %215 = sbr.rel (%p213) target = $region28
      $region27: #{tpu_custom_call.1} parent=23 // pred_region
        %p216 = scmp.lt.s32.totalorder %s18, 1
        %s217 = scalar_select %p216, %s18, 1
        %s218 = smul.addr %s217, 8
        %s219 = scalar_lea.vmem %s0, %s218
      $region28: #{tpu_custom_call.1} parent=23 // pred_fallthru
        _
      // Predicated region
      $region29: #{tpu_custom_call.1} parent=23 // pred_check
        %p220 = pneg %p95
      $region30: #{tpu_custom_call.1} parent=23 // pred_check_branch
        %222 = sbr.rel (%p220) target = $region32
      $region31: #{tpu_custom_call.1} parent=23 // pred_region
        %p223 = scmp.lt.s32.totalorder %s18, 1
        %s224 = scalar_select %p223, %s18, 1
        %s225 = smul.addr %s224, 8
        %s226 = scalar_lea.vmem %s2, %s225
      $region32: #{tpu_custom_call.1} parent=23 // pred_fallthru
        _
      // Predicated region
      $region33: #{tpu_custom_call.1} parent=23 // pred_check
        %p227 = pneg %p121
      $region34: #{tpu_custom_call.1} parent=23 // pred_check_branch
        %229 = sbr.rel (%p227) target = $region36
      $region35: #{tpu_custom_call.1} parent=23 // pred_region
        %p230 = scmp.lt.s32.totalorder %s18, 1
        %s231 = scalar_select %p230, %s18, 1
        %s232 = smul.addr %s231, 8
        %s233 = scalar_lea.vmem %s3, %s232
      $region36: #{tpu_custom_call.1} parent=23 // pred_fallthru
        _
    $region24: #{tpu_custom_call.1} parent=5 // pred_fallthru
      _
    %p234 = scmp.le.s32.totalorder 1, %s11
    %p235 = scmp.lt.s32.totalorder %s11, 3
    %p236 = pnand %p234, %p235
    %p237 = pneg %p236
    // Predicated region
    $region37: #{tpu_custom_call.1} parent=5 // pred_check
      _
    $region38: #{tpu_custom_call.1} parent=5 // pred_check_branch
      %239 = sbr.rel (%p236) target = $region40
    $region39: #{tpu_custom_call.1} parent=5 // pred_region
      %s240 = ssub.s32 %s11, 1
      %p241 = scmp.lt.s32.totalorder %s20, 1
      %s242 = scalar_select %p241, %s20, 1
      %s243 = smul.addr %s242, 8
      %s244 = scalar_lea.vmem %s0, %s243
      %p245 = pneg %p49
      %p246 = pneg %p46
      %p247 = scmp.lt.s32.totalorder %s21, 0
      %s248 = scalar_select %p247, %s21, 0
      %s249 = scalar_lea.vmem %s1, %s248
      %p250 = pneg %p75
      %p251 = pneg %p72
      %p252 = scmp.lt.s32.totalorder %s20, 1
      %s253 = scalar_select %p252, %s20, 1
      %s254 = smul.addr %s253, 8
      %s255 = scalar_lea.vmem %s2, %s254
      %p256 = pneg %p101
      %p257 = pneg %p98
      %p258 = scmp.lt.s32.totalorder %s20, 1
      %s259 = scalar_select %p258, %s20, 1
      %s260 = smul.addr %s259, 8
      %s261 = scalar_lea.vmem %s3, %s260
      %p262 = pneg %p127
      %p263 = pneg %p124
      %s264 = smul.u32 16, %s21
      %p265 = scmp.lt.s32.totalorder %s264, 15
      %s266 = scalar_select %p265, %s264, 15
      %s267 = smul.addr %s266, 8
      %s268 = scalar_lea.vmem %s4, %s267
      %p269 = pneg %p153
      %p270 = pneg %p150
      %p271 = pneg %p179
      %p272 = pneg %p176
      %p273 = scmp.lt.s32.totalorder %s20, 1
      %s274 = scalar_select %p273, %s20, 1
      %s275 = smul.addr %s274, 8
      %s276 = scalar_lea.vmem %s5, %s275
      %p277 = scmp.lt.s32.totalorder %s20, 1
      %s278 = scalar_select %p277, %s20, 1
      %s279 = smul.addr %s278, 8
      %s280 = scalar_lea.vmem %s0, %s279
      %p281 = scmp.lt.s32.totalorder %s21, 0
      %s282 = scalar_select %p281, %s21, 0
      %s283 = scalar_lea.vmem %s1, %s282
      %p284 = scmp.lt.s32.totalorder %s20, 1
      %s285 = scalar_select %p284, %s20, 1
      %s286 = smul.addr %s285, 8
      %s287 = scalar_lea.vmem %s2, %s286
      %p288 = scmp.lt.s32.totalorder %s20, 1
      %s289 = scalar_select %p288, %s20, 1
      %s290 = smul.addr %s289, 8
      %s291 = scalar_lea.vmem %s3, %s290
      %s292 = smul.u32 16, %s21
      %p293 = scmp.lt.s32.totalorder %s292, 15
      %s294 = scalar_select %p293, %s292, 15
      %s295 = smul.addr %s294, 8
      %s296 = scalar_lea.vmem %s4, %s295
      %s297 = smul.u32 16, %s21
      %p298 = scmp.lt.s32.totalorder %s20, 1
      %s299 = scalar_select %p298, %s20, 1
      %s300 = smul.addr %s299, 8
      %s301 = scalar_lea.vmem %s5, %s300
      %v302 = vld [vmem:[%s291] sm:$0xff]
      %v303 = vld [vmem:[%s296] sm:$0xff]
      %v304 = vld [vmem:[%s296 + $0x8] sm:$0xff]
      %v305 = vld [vmem:[%s296 + $0x10] sm:$0xff]
      %v306 = vld [vmem:[%s296 + $0x18] sm:$0xff]
      %v307 = vld [vmem:[%s296 + $0x20] sm:$0xff]
      %v308 = vld [vmem:[%s296 + $0x28] sm:$0xff]
      %v309 = vld [vmem:[%s296 + $0x30] sm:$0xff]
      %v310 = vld [vmem:[%s296 + $0x38] sm:$0xff]
      %v311 = vld [vmem:[%s296 + $0x40] sm:$0xff]
      %v312 = vld [vmem:[%s296 + $0x48] sm:$0xff]
      %v313 = vld [vmem:[%s296 + $0x50] sm:$0xff]
      %v314 = vld [vmem:[%s296 + $0x58] sm:$0xff]
      %v315 = vld [vmem:[%s296 + $0x60] sm:$0xff]
      %v316 = vld [vmem:[%s296 + $0x68] sm:$0xff]
      %v317 = vld [vmem:[%s296 + $0x70] sm:$0xff]
      %v318 = vld [vmem:[%s296 + $0x78] sm:$0xff]
      %vm319 = vcmask 261120
      %v321 = vsel %vm319, %v302, 0
      %v324 = vsel %vm319, %v303, 0
      %v327 = vsel %vm319, %v304, 0
      %v330 = vsel %vm319, %v305, 0
      %v333 = vsel %vm319, %v306, 0
      %v336 = vsel %vm319, %v307, 0
      %v339 = vsel %vm319, %v308, 0
      %v342 = vsel %vm319, %v309, 0
      %v345 = vsel %vm319, %v310, 0
      %v348 = vsel %vm319, %v311, 0
      %v351 = vsel %vm319, %v312, 0
      %v354 = vsel %vm319, %v313, 0
      %v357 = vsel %vm319, %v314, 0
      %v360 = vsel %vm319, %v315, 0
      %v363 = vsel %vm319, %v316, 0
      %v366 = vsel %vm319, %v317, 0
      %v369 = vsel %vm319, %v318, 0
      %371 = vmatprep.subr.mxu0 0.0
      %372 = vmatpush1.xpose.msra.mxu0 %v324
      %373 = vmatprep.subr.mxu0 0.0
      %374 = vmatpush1.xpose.msra.mxu0 %v327
      %375 = vmatprep.subr.mxu0 0.0
      %376 = vmatpush1.xpose.msra.mxu0 %v330
      %377 = vmatprep.subr.mxu0 0.0
      %378 = vmatpush1.xpose.msra.mxu0 %v333
      %379 = vmatprep.subr.mxu0 0.0
      %380 = vmatpush1.xpose.msra.mxu0 %v336
      %381 = vmatprep.subr.mxu0 0.0
      %382 = vmatpush1.xpose.msra.mxu0 %v339
      %383 = vmatprep.subr.mxu0 0.0
      %384 = vmatpush1.xpose.msra.mxu0 %v342
      %385 = vmatprep.subr.mxu0 0.0
      %386 = vmatpush1.xpose.msra.mxu0 %v345
      %387 = vmatprep.subr.mxu0 0.0
      %388 = vmatpush1.xpose.msra.mxu0 %v348
      %389 = vmatprep.subr.mxu0 0.0
      %390 = vmatpush1.xpose.msra.mxu0 %v351
      %391 = vmatprep.subr.mxu0 0.0
      %392 = vmatpush1.xpose.msra.mxu0 %v354
      %393 = vmatprep.subr.mxu0 0.0
      %394 = vmatpush1.xpose.msra.mxu0 %v357
      %395 = vmatprep.subr.mxu0 0.0
      %396 = vmatpush1.xpose.msra.mxu0 %v360
      %397 = vmatprep.subr.mxu0 0.0
      %398 = vmatpush1.xpose.msra.mxu0 %v363
      %399 = vmatprep.subr.mxu0 0.0
      %400 = vmatpush1.xpose.msra.mxu0 %v366
      %401 = vmatprep.subr.mxu0 0.0
      %402 = vmatpush1.xpose.msra.mxu0 %v369
      %403 = vmatprep.subr.mxu0 0.0
      %404 = vmatpush1.xpose.msra.mxu0 0.0
      %405 = vmatprep.subr.mxu0 0.0
      %406 = vmatpush1.xpose.msra.mxu0 0.0
      %407 = vmatprep.subr.mxu0 0.0
      %408 = vmatpush1.xpose.msra.mxu0 0.0
      %409 = vmatprep.subr.mxu0 0.0
      %410 = vmatpush1.xpose.msra.mxu0 0.0
      %411 = vmatprep.subr.mxu0 0.0
      %412 = vmatpush1.xpose.msra.mxu0 0.0
      %413 = vmatprep.subr.mxu0 0.0
      %414 = vmatpush1.xpose.msra.mxu0 0.0
      %415 = vmatprep.subr.mxu0 0.0
      %416 = vmatpush1.xpose.msra.mxu0 0.0
      %417 = vmatprep.subr.mxu0 0.0
      %418 = vmatpush1.xpose.msra.mxu0 0.0
      %419 = vmatprep.subr.mxu0 0.0
      %420 = vmatpush1.xpose.msra.mxu0 0.0
      %421 = vmatprep.subr.mxu0 0.0
      %422 = vmatpush1.xpose.msra.mxu0 0.0
      %423 = vmatprep.subr.mxu0 0.0
      %424 = vmatpush1.xpose.msra.mxu0 0.0
      %425 = vmatprep.subr.mxu0 0.0
      %426 = vmatpush1.xpose.msra.mxu0 0.0
      %427 = vmatprep.subr.mxu0 0.0
      %428 = vmatpush1.xpose.msra.mxu0 0.0
      %429 = vmatprep.subr.mxu0 0.0
      %430 = vmatpush1.xpose.msra.mxu0 0.0
      %431 = vmatprep.subr.mxu0 0.0
      %432 = vmatpush1.xpose.msra.mxu0 0.0
      %433 = vmatprep.subr.mxu0 0.0
      %434 = vmatpush1.xpose.msra.mxu0 0.0
      %435 = vmatprep.mubr.f32.mxu0 0.0
      %436 = vmatmul.mubr.f32.gmra.mrb[0].mxu0 %v321
      %v437 = vpop.f32.mrb[0].mxu0
      %v438 = vadd.f32 0.0, %v437
      %v439 = vpop.f32.mrb[0].mxu0
      %440 = vdwg.mxu0
      %v441 = vmul.f32 %v438, 14.285714
      %v442 = vlaneseq
      %v443 = vand.u32 %v442, 127
      %v444 = vlaneseq
      %v445 = vshrl.u32 %v444, 7
      %s446 = smul.u32 %s20, 8
      %s447 = smul.u32 %s21, 128
      %s448 = ssub.s32 %s446, %s447
      %v449 = vstv %s448
      %v450 = vadd.s32 %v445, %v449
      %vm451 = vcmp.ne.s32.totalorder %v443, %v450
      %s452 = ssub.s32 16, %s447
      %v453 = vstv %s452
      %vm454 = vcmp.lt.s32.totalorder %v443, %v453
      %vm455 = vmand %vm451, %vm454
      %v456 = vld [vmem:[%s280] sm:$0xff]
      %v457 = vld [vmem:[%s283] sm:$0x1]
      %458 = vset.pattern.permute.xlu0 0
      %459 = vperm.xlu0 %458, %v456
      %v460 = vpop.permute.xlu0 %459
      %v461 = vlaneseq
      %v462 = vshrl.u32 %v461, 7
      %v463 = vsub.s32 0, %v462
      %v464 = vrot.slane %v457, %v463
      %vm465 = vcmp.eq.s32.totalorder %v460, %v464
      %vm466 = vmand %vm465, %vm455
      %v467 = vsel %vm466, %v441, 0.0
      %468 = vadd.xlane.f32.xlu0 %v467
      %v469 = vpop.xlane.xlu0 %468
      %p470 = scmp.eq.s32.totalorder %s21, 0
      // Predicated region
      $region41: #{tpu_custom_call.1} parent=39 // pred_check
        %p471 = pneg %p470
      $region42: #{tpu_custom_call.1} parent=39 // pred_check_branch
        %473 = sbr.rel (%p471) target = $region44
      $region43: #{tpu_custom_call.1} parent=39 // pred_region
        %vm474 = vcmask 7168
        %475 = vst.msk [vmem:[#allocation2] sm:$0xff] %vm474, -1e+30
        %476 = vst.msk [vmem:[#allocation3] sm:$0xff] %vm474, 0.0
        %477 = vst.msk [vmem:[#allocation4] sm:$0xff] %vm474, 0.0
      $region44: #{tpu_custom_call.1} parent=39 // pred_fallthru
        _
      %v478 = vsel %vm455, %v441, -1e+30
      %479 = vmax.xlane.f32.xlu0 %v478
      %v480 = vpop.xlane.xlu0 %479
      %v481 = vld [vmem:[#allocation2] sm:$0xff]
      %v482 = vmax.f32 %v481, %v480
      %v483 = vsub.f32 %v481, %v482
      %v484 = vmul.f32 %v483, 1.442695
      %v485 = vpow.pop %v484
      %487 = vset.pattern.permute.xlu0 0
      %488 = vperm.xlu0 %487, %v482
      %v489 = vpop.permute.xlu0 %488
      %v491 = vsub.f32 %v441, %v489
      %v492 = vmul.f32 %v491, 1.442695
      %v493 = vpow.pop %v492
      %v494 = vsel %vm455, %v493, 0.0
      %495 = vadd.xlane.f32.xlu0 %v494
      %v496 = vpop.xlane.xlu0 %495
      %v497 = vld [vmem:[#allocation3] sm:$0xff]
      %v498 = vmul.f32 %v485, %v497
      %v499 = vadd.f32 %v498, %v496
      %vm500 = vcmask 7168
      %501 = vst.msk [vmem:[#allocation3] sm:$0xff] %vm500, %v499
      %v502 = vld [vmem:[#allocation4] sm:$0xff]
      %v503 = vadd.f32 %v502, %v469
      %504 = vst.msk [vmem:[#allocation4] sm:$0xff] %vm500, %v503
      %505 = vst.msk [vmem:[#allocation2] sm:$0xff] %vm500, %v482
      // Predicated region
      $region45: #{tpu_custom_call.1} parent=39 // pred_check
        %p506 = pneg %p470
      $region46: #{tpu_custom_call.1} parent=39 // pred_check_branch
        %508 = sbr.rel (%p506) target = $region48
      $region47: #{tpu_custom_call.1} parent=39 // pred_region
        %v509 = vld [vmem:[%s287] sm:$0xff]
        %v510 = vld [vmem:[#allocation2] sm:$0xff]
        %v511 = vld [vmem:[#allocation3] sm:$0xff]
        %v512 = vlog2.pop %v511
        %v513 = vmul.f32 %v512, 0.6931472
        %v514 = vadd.f32 %v510, %v513
        %vm515 = vcmp.lt.f32.partialorder %v509, 1e-06
        %v516 = vsel %vm515, 1.0, %v509
        %v517 = vld [vmem:[#allocation4] sm:$0xff]
        %v518 = vmul.f32 %v509, %v514
        %v519 = vsub.f32 %v517, %v518
        %v520 = vrcp.pop %v516
        %v521 = vmul.f32 %v519, %v520
        %v522 = vmul.f32 %v521, -1.0
        %523 = vst.msk [vmem:[%s301] sm:$0xff] %vm500, %v522
      $region48: #{tpu_custom_call.1} parent=39 // pred_fallthru
        _
      %p524 = scmp.lt.s32.totalorder %s20, 1
      %s525 = scalar_select %p524, %s20, 1
      %s526 = smul.addr %s525, 8
      %s527 = scalar_lea.vmem %s5, %s526
      // Predicated region
      $region49: #{tpu_custom_call.1} parent=39 // pred_check
        %p528 = pneg %p176
      $region50: #{tpu_custom_call.1} parent=39 // pred_check_branch
        %530 = sbr.rel (%p528) target = $region52
      $region51: #{tpu_custom_call.1} parent=39 // pred_region
        _
      $region52: #{tpu_custom_call.1} parent=39 // pred_fallthru
        _
    $region40: #{tpu_custom_call.1} parent=5 // pred_fallthru
      _
    %p531 = scmp.le.s32.totalorder 2, %s11
    // Predicated region
    $region53: #{tpu_custom_call.1} parent=5 // pred_check
      %p532 = pneg %p531
    $region54: #{tpu_custom_call.1} parent=5 // pred_check_branch
      %534 = sbr.rel (%p532) target = $region56
    $region55: #{tpu_custom_call.1} parent=5 // pred_region
      %s535 = ssub.s32 %s11, 2
      // Predicated region
      $region57: #{tpu_custom_call.1} parent=55 // pred_check
        %p536 = pneg %p182
      $region58: #{tpu_custom_call.1} parent=55 // pred_check_branch
        %538 = sbr.rel (%p536) target = $region60
      $region59: #{tpu_custom_call.1} parent=55 // pred_region
        %p539 = scmp.lt.s32.totalorder %s22, 1
        %s540 = scalar_select %p539, %s22, 1
        %s541 = smul.addr %s540, 8
        %s542 = scalar_lea.vmem %s5, %s541
      $region60: #{tpu_custom_call.1} parent=55 // pred_fallthru
        _
    $region56: #{tpu_custom_call.1} parent=5 // pred_fallthru
      _
  $region6: #{tpu_custom_call.1} parent=0 // loop_footer
    %s15 = sadd.s32 1, %s11
  $region7: #{tpu_custom_call.1} parent=0 // loop_footer_branch
    %10 = sbr.rel target = $region3
  $region8: #{tpu_custom_call.1} parent=0 // loop_exit
    _

// kernel: tpu_custom_call.1
$region0: #{tpu_custom_call.1}
  #allocation0 [shape = 'u32[]', space=smem, size = 0x4, offset = 0x4, fixed_abs, tag = 'smem constant byte address 0x4 - core index']
  #allocation1 [shape = 'u32[144,128]{1,0:T(1,128)}', space=vmem, size = 0x12000, scoped, tag = 'internal scratch']
  #allocation2 [shape = 'f32[8,1]{1,0:T(8,128)}', space=vmem, size = 0x1000, scoped, tag = 'scratch operand']
  #allocation3 [shape = 'f32[8,1]{1,0:T(8,128)}', space=vmem, size = 0x1000, scoped, tag = 'scratch operand']
  #allocation4 [shape = 'f32[8,1]{1,0:T(8,128)}', space=vmem, size = 0x1000, scoped, tag = 'scratch operand']
  %s0 = inlined_call_operand.vmem [shape: s32[16,1], index: 0, kind: input, shape index: {}]
  %s1 = inlined_call_operand.vmem [shape: s32[1,128], index: 1, kind: input, shape index: {}]
  %s2 = inlined_call_operand.vmem [shape: f32[16,1], index: 2, kind: input, shape index: {}]
  %s3 = inlined_call_operand.vmem [shape: f32[16,32], index: 3, kind: input, shape index: {}]
  %s4 = inlined_call_operand.vmem [shape: f32[128,32], index: 4, kind: input, shape index: {}]
  %s5 = inlined_call_operand.vmem [shape: f32[16,1], index: 5, kind: output, shape index: {}]
  %s6 = sld [smem:[#allocation0]]
  $region61: #{tpu_custom_call.1} parent=0
    _
  %s8 = ssub.s32 1, %s6
  %s9 = scalar_select 0, %s8, %s6
  loop: start=0, step=1, limit=4
  $region2: #{tpu_custom_call.1} parent=0 // loop_pre_header
    _
  $region3: #{tpu_custom_call.1} parent=0 // loop_header
    %s11 = sphi 0, %s15
    %p12 = scmp.ge.s32.totalorder %s11, 4
    %s18 = sphi 0, %s30
    %s19 = sphi 0, %s26
    %s20 = sphi 0, %s18
    %s21 = sphi 0, %s19
    %s22 = sphi 0, %s20
    %s23 = sphi 0, %s21
    %s33 = sphi 0, %s35
    %s36 = sphi 0, %s33
    %s37 = sphi 0, %s36
    %s53 = sphi 0, %s37
    %s59 = sphi 0, %s61
    %s62 = sphi 0, %s59
    %s63 = sphi 0, %s62
    %s79 = sphi 0, %s63
    %s85 = sphi 0, %s87
    %s88 = sphi 0, %s85
    %s89 = sphi 0, %s88
    %s105 = sphi 0, %s89
    %s111 = sphi 0, %s113
    %s114 = sphi 0, %s111
    %s115 = sphi 0, %s114
    %s131 = sphi 0, %s115
    %s137 = sphi 0, %s139
    %s140 = sphi 0, %s137
    %s141 = sphi 0, %s140
    %s157 = sphi 0, %s141
    %s163 = sphi 0, %s165
    %s166 = sphi 0, %s163
    %s167 = sphi 0, %s166
    %s183 = sphi 0, %s167
  $region4: #{tpu_custom_call.1} parent=0 // loop_header_branch
    %14 = sbr.rel (%p12) target = $region8
  $region5: #{tpu_custom_call.1} parent=0 // loop_body
    %s16 = ssub.s32 %s11, 1
    %s17 = ssub.s32 %s11, 2
    %s24 = sadd.s32 1, %s19
    %p25 = scmp.ge.s32.totalorder %s24, 1
    %s26 = scalar_select %p25, 0, %s24
    %s27 = sadd.s32 1, %s18
    %s28 = scalar_select %p25, %s27, %s18
    %p29 = scmp.ge.s32.totalorder %s28, 2
    %s30 = scalar_select %p29, 0, %s28
    %s31 = ssub.s32 %s18, %s30
    %p32 = scmp.eq.s32.totalorder %s31, 0
    %s34 = sadd.s32 %s33, 1
    %s35 = scalar_select %p32, %s33, %s34
    %p38 = pneg %p32
    %p39 = scmp.eq.s32.totalorder %s11, 1
    %p40 = por %p38, %p39
    %p41 = scmp.ne.s32.totalorder %s33, %s36
    %p42 = scmp.eq.s32.totalorder %s11, 0
    %p43 = por %p41, %p42
    %p44 = scmp.ne.s32.totalorder %s33, %s36
    %p45 = scmp.eq.s32.totalorder %s16, 1
    %p46 = por %p44, %p45
    %p47 = scmp.ne.s32.totalorder %s36, %s37
    %p48 = scmp.eq.s32.totalorder %s16, 0
    %p49 = por %p47, %p48
    %p50 = scmp.ne.s32.totalorder %s36, %s37
    %p51 = scmp.eq.s32.totalorder %s17, 1
    %p52 = por %p50, %p51
    %p54 = scmp.ne.s32.totalorder %s37, %s53
    %p55 = scmp.eq.s32.totalorder %s17, 0
    %p56 = por %p54, %p55
    %s57 = ssub.s32 %s19, %s26
    %p58 = scmp.eq.s32.totalorder %s57, 0
    %s60 = sadd.s32 %s59, 1
    %s61 = scalar_select %p58, %s59, %s60
    %p64 = pneg %p58
    %p65 = scmp.eq.s32.totalorder %s11, 1
    %p66 = por %p64, %p65
    %p67 = scmp.ne.s32.totalorder %s59, %s62
    %p68 = scmp.eq.s32.totalorder %s11, 0
    %p69 = por %p67, %p68
    %p70 = scmp.ne.s32.totalorder %s59, %s62
    %p71 = scmp.eq.s32.totalorder %s16, 1
    %p72 = por %p70, %p71
    %p73 = scmp.ne.s32.totalorder %s62, %s63
    %p74 = scmp.eq.s32.totalorder %s16, 0
    %p75 = por %p73, %p74
    %p76 = scmp.ne.s32.totalorder %s62, %s63
    %p77 = scmp.eq.s32.totalorder %s17, 1
    %p78 = por %p76, %p77
    %p80 = scmp.ne.s32.totalorder %s63, %s79
    %p81 = scmp.eq.s32.totalorder %s17, 0
    %p82 = por %p80, %p81
    %s83 = ssub.s32 %s18, %s30
    %p84 = scmp.eq.s32.totalorder %s83, 0
    %s86 = sadd.s32 %s85, 1
    %s87 = scalar_select %p84, %s85, %s86
    %p90 = pneg %p84
    %p91 = scmp.eq.s32.totalorder %s11, 1
    %p92 = por %p90, %p91
    %p93 = scmp.ne.s32.totalorder %s85, %s88
    %p94 = scmp.eq.s32.totalorder %s11, 0
    %p95 = por %p93, %p94
    %p96 = scmp.ne.s32.totalorder %s85, %s88
    %p97 = scmp.eq.s32.totalorder %s16, 1
    %p98 = por %p96, %p97
    %p99 = scmp.ne.s32.totalorder %s88, %s89
    %p100 = scmp.eq.s32.totalorder %s16, 0
    %p101 = por %p99, %p100
    %p102 = scmp.ne.s32.totalorder %s88, %s89
    %p103 = scmp.eq.s32.totalorder %s17, 1
    %p104 = por %p102, %p103
    %p106 = scmp.ne.s32.totalorder %s89, %s105
    %p107 = scmp.eq.s32.totalorder %s17, 0
    %p108 = por %p106, %p107
    %s109 = ssub.s32 %s18, %s30
    %p110 = scmp.eq.s32.totalorder %s109, 0
    %s112 = sadd.s32 %s111, 1
    %s113 = scalar_select %p110, %s111, %s112
    %p116 = pneg %p110
    %p117 = scmp.eq.s32.totalorder %s11, 1
    %p118 = por %p116, %p117
    %p119 = scmp.ne.s32.totalorder %s111, %s114
    %p120 = scmp.eq.s32.totalorder %s11, 0
    %p121 = por %p119, %p120
    %p122 = scmp.ne.s32.totalorder %s111, %s114
    %p123 = scmp.eq.s32.totalorder %s16, 1
    %p124 = por %p122, %p123
    %p125 = scmp.ne.s32.totalorder %s114, %s115
    %p126 = scmp.eq.s32.totalorder %s16, 0
    %p127 = por %p125, %p126
    %p128 = scmp.ne.s32.totalorder %s114, %s115
    %p129 = scmp.eq.s32.totalorder %s17, 1
    %p130 = por %p128, %p129
    %p132 = scmp.ne.s32.totalorder %s115, %s131
    %p133 = scmp.eq.s32.totalorder %s17, 0
    %p134 = por %p132, %p133
    %s135 = ssub.s32 %s19, %s26
    %p136 = scmp.eq.s32.totalorder %s135, 0
    %s138 = sadd.s32 %s137, 1
    %s139 = scalar_select %p136, %s137, %s138
    %p142 = pneg %p136
    %p143 = scmp.eq.s32.totalorder %s11, 1
    %p144 = por %p142, %p143
    %p145 = scmp.ne.s32.totalorder %s137, %s140
    %p146 = scmp.eq.s32.totalorder %s11, 0
    %p147 = por %p145, %p146
    %p148 = scmp.ne.s32.totalorder %s137, %s140
    %p149 = scmp.eq.s32.totalorder %s16, 1
    %p150 = por %p148, %p149
    %p151 = scmp.ne.s32.totalorder %s140, %s141
    %p152 = scmp.eq.s32.totalorder %s16, 0
    %p153 = por %p151, %p152
    %p154 = scmp.ne.s32.totalorder %s140, %s141
    %p155 = scmp.eq.s32.totalorder %s17, 1
    %p156 = por %p154, %p155
    %p158 = scmp.ne.s32.totalorder %s141, %s157
    %p159 = scmp.eq.s32.totalorder %s17, 0
    %p160 = por %p158, %p159
    %s161 = ssub.s32 %s18, %s30
    %p162 = scmp.eq.s32.totalorder %s161, 0
    %s164 = sadd.s32 %s163, 1
    %s165 = scalar_select %p162, %s163, %s164
    %p168 = pneg %p162
    %p169 = scmp.eq.s32.totalorder %s11, 1
    %p170 = por %p168, %p169
    %p171 = scmp.ne.s32.totalorder %s163, %s166
    %p172 = scmp.eq.s32.totalorder %s11, 0
    %p173 = por %p171, %p172
    %p174 = scmp.ne.s32.totalorder %s163, %s166
    %p175 = scmp.eq.s32.totalorder %s16, 1
    %p176 = por %p174, %p175
    %p177 = scmp.ne.s32.totalorder %s166, %s167
    %p178 = scmp.eq.s32.totalorder %s16, 0
    %p179 = por %p177, %p178
    %p180 = scmp.ne.s32.totalorder %s166, %s167
    %p181 = scmp.eq.s32.totalorder %s17, 1
    %p182 = por %p180, %p181
    %p184 = scmp.ne.s32.totalorder %s167, %s183
    %p185 = scmp.eq.s32.totalorder %s17, 0
    %p186 = por %p184, %p185
    %p187 = scmp.le.s32.totalorder 1, %s11
    %p188 = scmp.lt.s32.totalorder %s11, 3
    %p189 = pnand %p187, %p188
    %p190 = pneg %p189
    // Predicated region
    $region9: #{tpu_custom_call.1} parent=5 // pred_check
      _
    $region10: #{tpu_custom_call.1} parent=5 // pred_check_branch
      %192 = sbr.rel (%p189) target = $region12
    $region11: #{tpu_custom_call.1} parent=5 // pred_region
      %s193 = ssub.s32 %s11, 1
      // Predicated region
      $region13: #{tpu_custom_call.1} parent=11 // pred_check
        %p194 = pneg %p75
      $region14: #{tpu_custom_call.1} parent=11 // pred_check_branch
        %196 = sbr.rel (%p194) target = $region16
      $region15: #{tpu_custom_call.1} parent=11 // pred_region
        %p197 = scmp.lt.s32.totalorder %s21, 0
        %s198 = scalar_select %p197, %s21, 0
        %s199 = scalar_lea.vmem %s1, %s198
      $region16: #{tpu_custom_call.1} parent=11 // pred_fallthru
        _
      // Predicated region
      $region17: #{tpu_custom_call.1} parent=11 // pred_check
        %p200 = pneg %p153
      $region18: #{tpu_custom_call.1} parent=11 // pred_check_branch
        %202 = sbr.rel (%p200) target = $region20
      $region19: #{tpu_custom_call.1} parent=11 // pred_region
        %s203 = smul.u32 16, %s21
        %p204 = scmp.lt.s32.totalorder %s203, 15
        %s205 = scalar_select %p204, %s203, 15
        %s206 = smul.addr %s205, 8
        %s207 = scalar_lea.vmem %s4, %s206
        %s208 = smul.u32 16, %s21
      $region20: #{tpu_custom_call.1} parent=11 // pred_fallthru
        _
    $region12: #{tpu_custom_call.1} parent=5 // pred_fallthru
      _
    %p209 = scmp.lt.s32.totalorder %s11, 2
    // Predicated region
    $region21: #{tpu_custom_call.1} parent=5 // pred_check
      %p210 = pneg %p209
    $region22: #{tpu_custom_call.1} parent=5 // pred_check_branch
      %212 = sbr.rel (%p210) target = $region24
    $region23: #{tpu_custom_call.1} parent=5 // pred_region
      // Predicated region
      $region25: #{tpu_custom_call.1} parent=23 // pred_check
        %p213 = pneg %p43
      $region26: #{tpu_custom_call.1} parent=23 // pred_check_branch
        %215 = sbr.rel (%p213) target = $region28
      $region27: #{tpu_custom_call.1} parent=23 // pred_region
        %p216 = scmp.lt.s32.totalorder %s18, 1
        %s217 = scalar_select %p216, %s18, 1
        %s218 = smul.addr %s217, 8
        %s219 = scalar_lea.vmem %s0, %s218
      $region28: #{tpu_custom_call.1} parent=23 // pred_fallthru
        _
      // Predicated region
      $region29: #{tpu_custom_call.1} parent=23 // pred_check
        %p220 = pneg %p95
      $region30: #{tpu_custom_call.1} parent=23 // pred_check_branch
        %222 = sbr.rel (%p220) target = $region32
      $region31: #{tpu_custom_call.1} parent=23 // pred_region
        %p223 = scmp.lt.s32.totalorder %s18, 1
        %s224 = scalar_select %p223, %s18, 1
        %s225 = smul.addr %s224, 8
        %s226 = scalar_lea.vmem %s2, %s225
      $region32: #{tpu_custom_call.1} parent=23 // pred_fallthru
        _
      // Predicated region
      $region33: #{tpu_custom_call.1} parent=23 // pred_check
        %p227 = pneg %p121
      $region34: #{tpu_custom_call.1} parent=23 // pred_check_branch
        %229 = sbr.rel (%p227) target = $region36
      $region35: #{tpu_custom_call.1} parent=23 // pred_region
        %p230 = scmp.lt.s32.totalorder %s18, 1
        %s231 = scalar_select %p230, %s18, 1
        %s232 = smul.addr %s231, 8
        %s233 = scalar_lea.vmem %s3, %s232
      $region36: #{tpu_custom_call.1} parent=23 // pred_fallthru
        _
    $region24: #{tpu_custom_call.1} parent=5 // pred_fallthru
      _
    %p234 = scmp.le.s32.totalorder 1, %s11
    %p235 = scmp.lt.s32.totalorder %s11, 3
    %p236 = pnand %p234, %p235
    %p237 = pneg %p236
    // Predicated region
    $region37: #{tpu_custom_call.1} parent=5 // pred_check
      _
    $region38: #{tpu_custom_call.1} parent=5 // pred_check_branch
      %239 = sbr.rel (%p236) target = $region40
    $region39: #{tpu_custom_call.1} parent=5 // pred_region
      %s240 = ssub.s32 %s11, 1
      %p241 = scmp.lt.s32.totalorder %s20, 1
      %s242 = scalar_select %p241, %s20, 1
      %s243 = smul.addr %s242, 8
      %s244 = scalar_lea.vmem %s0, %s243
      %p245 = pneg %p49
      %p246 = pneg %p46
      %p247 = scmp.lt.s32.totalorder %s21, 0
      %s248 = scalar_select %p247, %s21, 0
      %s249 = scalar_lea.vmem %s1, %s248
      %p250 = pneg %p75
      %p251 = pneg %p72
      %p252 = scmp.lt.s32.totalorder %s20, 1
      %s253 = scalar_select %p252, %s20, 1
      %s254 = smul.addr %s253, 8
      %s255 = scalar_lea.vmem %s2, %s254
      %p256 = pneg %p101
      %p257 = pneg %p98
      %p258 = scmp.lt.s32.totalorder %s20, 1
      %s259 = scalar_select %p258, %s20, 1
      %s260 = smul.addr %s259, 8
      %s261 = scalar_lea.vmem %s3, %s260
      %p262 = pneg %p127
      %p263 = pneg %p124
      %s264 = smul.u32 16, %s21
      %p265 = scmp.lt.s32.totalorder %s264, 15
      %s266 = scalar_select %p265, %s264, 15
      %s267 = smul.addr %s266, 8
      %s268 = scalar_lea.vmem %s4, %s267
      %p269 = pneg %p153
      %p270 = pneg %p150
      %p271 = pneg %p179
      %p272 = pneg %p176
      %p273 = scmp.lt.s32.totalorder %s20, 1
      %s274 = scalar_select %p273, %s20, 1
      %s275 = smul.addr %s274, 8
      %s276 = scalar_lea.vmem %s5, %s275
      %p277 = scmp.lt.s32.totalorder %s20, 1
      %s278 = scalar_select %p277, %s20, 1
      %s279 = smul.addr %s278, 8
      %s280 = scalar_lea.vmem %s0, %s279
      %p281 = scmp.lt.s32.totalorder %s21, 0
      %s282 = scalar_select %p281, %s21, 0
      %s283 = scalar_lea.vmem %s1, %s282
      %p284 = scmp.lt.s32.totalorder %s20, 1
      %s285 = scalar_select %p284, %s20, 1
      %s286 = smul.addr %s285, 8
      %s287 = scalar_lea.vmem %s2, %s286
      %p288 = scmp.lt.s32.totalorder %s20, 1
      %s289 = scalar_select %p288, %s20, 1
      %s290 = smul.addr %s289, 8
      %s291 = scalar_lea.vmem %s3, %s290
      %s292 = smul.u32 16, %s21
      %p293 = scmp.lt.s32.totalorder %s292, 15
      %s294 = scalar_select %p293, %s292, 15
      %s295 = smul.addr %s294, 8
      %s296 = scalar_lea.vmem %s4, %s295
      %s297 = smul.u32 16, %s21
      %p298 = scmp.lt.s32.totalorder %s20, 1
      %s299 = scalar_select %p298, %s20, 1
      %s300 = smul.addr %s299, 8
      %s301 = scalar_lea.vmem %s5, %s300
      %v302 = vld [vmem:[%s291] sm:$0xff]
      %v303 = vld [vmem:[%s296] sm:$0xff]
      %v304 = vld [vmem:[%s296 + $0x8] sm:$0xff]
      %v305 = vld [vmem:[%s296 + $0x10] sm:$0xff]
      %v306 = vld [vmem:[%s296 + $0x18] sm:$0xff]
      %v307 = vld [vmem:[%s296 + $0x20] sm:$0xff]
      %v308 = vld [vmem:[%s296 + $0x28] sm:$0xff]
      %v309 = vld [vmem:[%s296 + $0x30] sm:$0xff]
      %v310 = vld [vmem:[%s296 + $0x38] sm:$0xff]
      %v311 = vld [vmem:[%s296 + $0x40] sm:$0xff]
      %v312 = vld [vmem:[%s296 + $0x48] sm:$0xff]
      %v313 = vld [vmem:[%s296 + $0x50] sm:$0xff]
      %v314 = vld [vmem:[%s296 + $0x58] sm:$0xff]
      %v315 = vld [vmem:[%s296 + $0x60] sm:$0xff]
      %v316 = vld [vmem:[%s296 + $0x68] sm:$0xff]
      %v317 = vld [vmem:[%s296 + $0x70] sm:$0xff]
      %v318 = vld [vmem:[%s296 + $0x78] sm:$0xff]
      %vm319 = vcmask 261120
      %v321 = vsel %vm319, %v302, 0
      %v324 = vsel %vm319, %v303, 0
      %v327 = vsel %vm319, %v304, 0
      %v330 = vsel %vm319, %v305, 0
      %v333 = vsel %vm319, %v306, 0
      %v336 = vsel %vm319, %v307, 0
      %v339 = vsel %vm319, %v308, 0
      %v342 = vsel %vm319, %v309, 0
      %v345 = vsel %vm319, %v310, 0
      %v348 = vsel %vm319, %v311, 0
      %v351 = vsel %vm319, %v312, 0
      %v354 = vsel %vm319, %v313, 0
      %v357 = vsel %vm319, %v314, 0
      %v360 = vsel %vm319, %v315, 0
      %v363 = vsel %vm319, %v316, 0
      %v366 = vsel %vm319, %v317, 0
      %v369 = vsel %vm319, %v318, 0
      %371 = vmatprep.subr.mxu0 0.0
      %372 = vmatpush1.xpose.msra.mxu0 %v324
      %373 = vmatprep.subr.mxu0 0.0
      %374 = vmatpush1.xpose.msra.mxu0 %v327
      %375 = vmatprep.subr.mxu0 0.0
      %376 = vmatpush1.xpose.msra.mxu0 %v330
      %377 = vmatprep.subr.mxu0 0.0
      %378 = vmatpush1.xpose.msra.mxu0 %v333
      %379 = vmatprep.subr.mxu0 0.0
      %380 = vmatpush1.xpose.msra.mxu0 %v336
      %381 = vmatprep.subr.mxu0 0.0
      %382 = vmatpush1.xpose.msra.mxu0 %v339
      %383 = vmatprep.subr.mxu0 0.0
      %384 = vmatpush1.xpose.msra.mxu0 %v342
      %385 = vmatprep.subr.mxu0 0.0
      %386 = vmatpush1.xpose.msra.mxu0 %v345
      %387 = vmatprep.subr.mxu0 0.0
      %388 = vmatpush1.xpose.msra.mxu0 %v348
      %389 = vmatprep.subr.mxu0 0.0
      %390 = vmatpush1.xpose.msra.mxu0 %v351
      %391 = vmatprep.subr.mxu0 0.0
      %392 = vmatpush1.xpose.msra.mxu0 %v354
      %393 = vmatprep.subr.mxu0 0.0
      %394 = vmatpush1.xpose.msra.mxu0 %v357
      %395 = vmatprep.subr.mxu0 0.0
      %396 = vmatpush1.xpose.msra.mxu0 %v360
      %397 = vmatprep.subr.mxu0 0.0
      %398 = vmatpush1.xpose.msra.mxu0 %v363
      %399 = vmatprep.subr.mxu0 0.0
      %400 = vmatpush1.xpose.msra.mxu0 %v366
      %401 = vmatprep.subr.mxu0 0.0
      %402 = vmatpush1.xpose.msra.mxu0 %v369
      %403 = vmatprep.subr.mxu0 0.0
      %404 = vmatpush1.xpose.msra.mxu0 0.0
      %405 = vmatprep.subr.mxu0 0.0
      %406 = vmatpush1.xpose.msra.mxu0 0.0
      %407 = vmatprep.subr.mxu0 0.0
      %408 = vmatpush1.xpose.msra.mxu0 0.0
      %409 = vmatprep.subr.mxu0 0.0
      %410 = vmatpush1.xpose.msra.mxu0 0.0
      %411 = vmatprep.subr.mxu0 0.0
      %412 = vmatpush1.xpose.msra.mxu0 0.0
      %413 = vmatprep.subr.mxu0 0.0
      %414 = vmatpush1.xpose.msra.mxu0 0.0
      %415 = vmatprep.subr.mxu0 0.0
      %416 = vmatpush1.xpose.msra.mxu0 0.0
      %417 = vmatprep.subr.mxu0 0.0
      %418 = vmatpush1.xpose.msra.mxu0 0.0
      %419 = vmatprep.subr.mxu0 0.0
      %420 = vmatpush1.xpose.msra.mxu0 0.0
      %421 = vmatprep.subr.mxu0 0.0
      %422 = vmatpush1.xpose.msra.mxu0 0.0
      %423 = vmatprep.subr.mxu0 0.0
      %424 = vmatpush1.xpose.msra.mxu0 0.0
      %425 = vmatprep.subr.mxu0 0.0
      %426 = vmatpush1.xpose.msra.mxu0 0.0
      %427 = vmatprep.subr.mxu0 0.0
      %428 = vmatpush1.xpose.msra.mxu0 0.0
      %429 = vmatprep.subr.mxu0 0.0
      %430 = vmatpush1.xpose.msra.mxu0 0.0
      %431 = vmatprep.subr.mxu0 0.0
      %432 = vmatpush1.xpose.msra.mxu0 0.0
      %433 = vmatprep.subr.mxu0 0.0
      %434 = vmatpush1.xpose.msra.mxu0 0.0
      %435 = vmatprep.mubr.f32.mxu0 0.0
      %436 = vmatmul.mubr.f32.gmra.mrb[0].mxu0 %v321
      %v437 = vpop.f32.mrb[0].mxu0
      %v438 = vadd.f32 0.0, %v437
      %v439 = vpop.f32.mrb[0].mxu0
      %440 = vdwg.mxu0
      %v441 = vmul.f32 %v438, 14.285714
      %v442 = vlaneseq
      %v443 = vand.u32 %v442, 127
      %v444 = vlaneseq
      %v445 = vshrl.u32 %v444, 7
      %s446 = smul.u32 %s20, 8
      %s447 = smul.u32 %s21, 128
      %s448 = ssub.s32 %s446, %s447
      %v449 = vstv %s448
      %v450 = vadd.s32 %v445, %v449
      %vm451 = vcmp.ne.s32.totalorder %v443, %v450
      %s452 = ssub.s32 16, %s447
      %v453 = vstv %s452
      %vm454 = vcmp.lt.s32.totalorder %v443, %v453
      %vm455 = vmand %vm451, %vm454
      %v456 = vld [vmem:[%s280] sm:$0xff]
      %v457 = vld [vmem:[%s283] sm:$0x1]
      %458 = vset.pattern.permute.xlu0 0
      %459 = vperm.xlu0 %458, %v456
      %v460 = vpop.permute.xlu0 %459
      %v461 = vlaneseq
      %v462 = vshrl.u32 %v461, 7
      %v463 = vsub.s32 0, %v462
      %v464 = vrot.slane %v457, %v463
      %vm465 = vcmp.eq.s32.totalorder %v460, %v464
      %vm466 = vmand %vm465, %vm455
      %v467 = vsel %vm466, %v441, 0.0
      %468 = vadd.xlane.f32.xlu0 %v467
      %v469 = vpop.xlane.xlu0 %468
      %p470 = scmp.eq.s32.totalorder %s21, 0
      // Predicated region
      $region41: #{tpu_custom_call.1} parent=39 // pred_check
        %p471 = pneg %p470
      $region42: #{tpu_custom_call.1} parent=39 // pred_check_branch
        %473 = sbr.rel (%p471) target = $region44
      $region43: #{tpu_custom_call.1} parent=39 // pred_region
        %vm474 = vcmask 7168
        %475 = vst.msk [vmem:[#allocation2] sm:$0xff] %vm474, -1e+30
        %476 = vst.msk [vmem:[#allocation3] sm:$0xff] %vm474, 0.0
        %477 = vst.msk [vmem:[#allocation4] sm:$0xff] %vm474, 0.0
      $region44: #{tpu_custom_call.1} parent=39 // pred_fallthru
        _
      %v478 = vsel %vm455, %v441, -1e+30
      %479 = vmax.xlane.f32.xlu0 %v478
      %v480 = vpop.xlane.xlu0 %479
      %v481 = vld [vmem:[#allocation2] sm:$0xff]
      %v482 = vmax.f32 %v481, %v480
      %v483 = vsub.f32 %v481, %v482
      %v484 = vmul.f32 %v483, 1.442695
      %v485 = vpow.pop %v484
      %487 = vset.pattern.permute.xlu0 0
      %488 = vperm.xlu0 %487, %v482
      %v489 = vpop.permute.xlu0 %488
      %v491 = vsub.f32 %v441, %v489
      %v492 = vmul.f32 %v491, 1.442695
      %v493 = vpow.pop %v492
      %v494 = vsel %vm455, %v493, 0.0
      %495 = vadd.xlane.f32.xlu0 %v494
      %v496 = vpop.xlane.xlu0 %495
      %v497 = vld [vmem:[#allocation3] sm:$0xff]
      %v498 = vmul.f32 %v485, %v497
      %v499 = vadd.f32 %v498, %v496
      %vm500 = vcmask 7168
      %501 = vst.msk [vmem:[#allocation3] sm:$0xff] %vm500, %v499
      %v502 = vld [vmem:[#allocation4] sm:$0xff]
      %v503 = vadd.f32 %v502, %v469
      %504 = vst.msk [vmem:[#allocation4] sm:$0xff] %vm500, %v503
      %505 = vst.msk [vmem:[#allocation2] sm:$0xff] %vm500, %v482
      // Predicated region
      $region45: #{tpu_custom_call.1} parent=39 // pred_check
        %p506 = pneg %p470
      $region46: #{tpu_custom_call.1} parent=39 // pred_check_branch
        %508 = sbr.rel (%p506) target = $region48
      $region47: #{tpu_custom_call.1} parent=39 // pred_region
        %v509 = vld [vmem:[%s287] sm:$0xff]
        %v510 = vld [vmem:[#allocation2] sm:$0xff]
        %v511 = vld [vmem:[#allocation3] sm:$0xff]
        %v512 = vlog2.pop %v511
        %v513 = vmul.f32 %v512, 0.6931472
        %v514 = vadd.f32 %v510, %v513
        %vm515 = vcmp.lt.f32.partialorder %v509, 1e-06
        %v516 = vsel %vm515, 1.0, %v509
        %v517 = vld [vmem:[#allocation4] sm:$0xff]
        %v518 = vmul.f32 %v509, %v514
        %v519 = vsub.f32 %v517, %v518
        %v520 = vrcp.pop %v516
        %v521 = vmul.f32 %v519, %v520
        %v522 = vmul.f32 %v521, -1.0
        %523 = vst.msk [vmem:[%s301] sm:$0xff] %vm500, %v522
      $region48: #{tpu_custom_call.1} parent=39 // pred_fallthru
        _
      %p524 = scmp.lt.s32.totalorder %s20, 1
      %s525 = scalar_select %p524, %s20, 1
      %s526 = smul.addr %s525, 8
      %s527 = scalar_lea.vmem %s5, %s526
      // Predicated region
      $region49: #{tpu_custom_call.1} parent=39 // pred_check
        %p528 = pneg %p176
      $region50: #{tpu_custom_call.1} parent=39 // pred_check_branch
        %530 = sbr.rel (%p528) target = $region52
      $region51: #{tpu_custom_call.1} parent=39 // pred_region
        _
      $region52: #{tpu_custom_call.1} parent=39 // pred_fallthru
        _
    $region40: #{tpu_custom_call.1} parent=5 // pred_fallthru
      _
    %p531 = scmp.le.s32.totalorder 2, %s11
    // Predicated region
    $region53: #{tpu_custom_call.1} parent=5 // pred_check
      %p532 = pneg %p531
    $region54: #{tpu_custom_call.1} parent=5 // pred_check_branch
      %534 = sbr.rel (%p532) target = $region56
    $region55: #{tpu_custom_call.1} parent=5 // pred_region
      %s535 = ssub.s32 %s11, 2
      // Predicated region
      $region57: #{tpu_custom_call.1} parent=55 // pred_check
        %p536 = pneg %p182
      $region58: #{tpu_custom_call.1} parent=55 // pred_check_branch
        %538 = sbr.rel (%p536) target = $region60
      $region59: #{tpu_custom_call.1} parent=55 // pred_region
        %p539 = scmp.lt.s32.totalorder %s22, 1
        %s540 = scalar_select %p539, %s22, 1
        %s541 = smul.addr %s540, 8
        %s542 = scalar_lea.vmem %s5, %s541
      $region60: #{tpu_custom_call.1} parent=55 // pred_fallthru
        _
    $region56: #{tpu_custom_call.1} parent=5 // pred_fallthru
      _
  $region6: #{tpu_custom_call.1} parent=0 // loop_footer
    %s15 = sadd.s32 1, %s11
  $region7: #{tpu_custom_call.1} parent=0 // loop_footer_branch
    %10 = sbr.rel target = $region3
  $region8: #{tpu_custom_call.1} parent=0 // loop_exit
    _

</llo_original>
